<compile_context>
chip_gen: v7x
topology: tpu7x:2x2x1
jax: 0.10.0
libtpu: 0.0.40
codegen_flags: <defaults>
</compile_context>

<pallas_src>
import functools

import jax
import jax.numpy as jnp
import numpy as np
from jax import lax
from jax.experimental import pallas as pl
from jax.experimental.pallas import tpu as pltpu

INPUT_SIZE = 2
N_NEURONS = 2
N_LAYERS = 9          # 9 hidden (2->2, tanh) linear layers
OUTPUT_SIZE = 3

LANES = 128
STRIP_SUBLANES = 64           # register-resident strip: 8 vregs per value
MAX_TILE_SUBLANES = 512       # up to 512 sublanes x 128 lanes = 65536 rows/step


def _cppn_kernel(wh_ref, bh_ref, wo_ref, bo_ref, x_ref, o_ref):
    # wh_ref: (36,) SMEM scalar-prefetch, w[l, i, j] at 4*l + 2*i + j  (in, out)
    # bh_ref: (18,) SMEM ;  wo_ref: (6,) SMEM, w[i, j] at 3*i + j ;  bo_ref: (3,)
    # x_ref:  (INPUT_SIZE,  tile_sublanes, LANES)  VMEM, channel-major
    # o_ref:  (OUTPUT_SIZE, tile_sublanes, LANES)  VMEM, lane-dense stores
    #
    # Hoist all 63 scalar parameter reads out of the compute chain.
    wh = [wh_ref[i] for i in range(N_LAYERS * N_NEURONS * N_NEURONS)]
    bh = [bh_ref[i] for i in range(N_LAYERS * N_NEURONS)]
    wo = [wo_ref[i] for i in range(N_NEURONS * OUTPUT_SIZE)]
    bo = [bo_ref[i] for i in range(OUTPUT_SIZE)]

    n_strips = x_ref.shape[1] // STRIP_SUBLANES

    def strip_body(s, carry):
        off = pl.multiple_of(s * STRIP_SUBLANES, STRIP_SUBLANES)
        h0 = x_ref[0, pl.ds(off, STRIP_SUBLANES), :]     # (64, 128) f32
        h1 = x_ref[1, pl.ds(off, STRIP_SUBLANES), :]

        # Statically unrolled hidden layers: scalar-broadcast VPU FMAs + EUP
        # tanh; no MXU (a 2-wide contraction would waste the 256-wide MXU).
        for l in range(N_LAYERS):
            n0 = jnp.tanh(h0 * wh[4 * l + 0] + h1 * wh[4 * l + 2] + bh[2 * l + 0])
            n1 = jnp.tanh(h0 * wh[4 * l + 1] + h1 * wh[4 * l + 3] + bh[2 * l + 1])
            h0, h1 = n0, n1

        # Output layer 2 -> 3; sigmoid(z) == 0.5*tanh(0.5*z) + 0.5  (1 EUP op).
        for c in range(OUTPUT_SIZE):
            z = h0 * wo[c] + h1 * wo[OUTPUT_SIZE + c] + bo[c]
            o_ref[c, pl.ds(off, STRIP_SUBLANES), :] = 0.5 * jnp.tanh(0.5 * z) + 0.5
        return carry

    # fori_loop (not a Python for) bounds live ranges: each strip's chain
    # stays in vregs, so large tiles don't spill intermediates to VMEM.
    lax.fori_loop(0, n_strips, strip_body, 0)


def _cppn_pallas_call(x_planes, w_hidden, b_hidden, w_out, b_out, tile_sublanes):
    """x_planes: [2, R, 128] channel-major with R % tile_sublanes == 0."""
    r = x_planes.shape[1]
    grid = (r // tile_sublanes,)

    # Flat f32 parameter tables (expected (in, out) order).
    wh = w_hidden.reshape(-1).astype(jnp.float32)    # (36,)
    bh = b_hidden.reshape(-1).astype(jnp.float32)    # (18,)
    wo = w_out.reshape(-1).astype(jnp.float32)       # (6,)
    bo = b_out.reshape(-1).astype(jnp.float32)       # (3,)

    return pl.pallas_call(
        _cppn_kernel,
        out_shape=jax.ShapeDtypeStruct((OUTPUT_SIZE, r, LANES), jnp.float32),
        grid_spec=pltpu.PrefetchScalarGridSpec(
            num_scalar_prefetch=4,                   # params resident in SMEM
            grid=grid,
            in_specs=[
                pl.BlockSpec((INPUT_SIZE, tile_sublanes, LANES),
                             lambda i, *prefetch: (0, i, 0)),
            ],
            out_specs=pl.BlockSpec((OUTPUT_SIZE, tile_sublanes, LANES),
                                   lambda i, *prefetch: (0, i, 0)),
        ),
        compiler_params=pltpu.CompilerParams(
            dimension_semantics=("parallel",),       # megacore-shardable grid
        ),
    )(wh, bh, wo, bo, x_planes)


def _pick_tile_sublanes(n_rows, max_sublanes=MAX_TILE_SUBLANES):
    """Largest strip-multiple tile <= max_sublanes that yields an even grid
    (>= 2 steps) when there is enough work, so both v7x TCs get equal work."""
    need = pl.cdiv(max(n_rows, 1), LANES)            # sublanes needed overall
    per_core = pl.cdiv(need, 2)                      # aim for grid length 2
    s = min(max_sublanes, max(STRIP_SUBLANES, per_core))
    return pl.cdiv(s, STRIP_SUBLANES) * STRIP_SUBLANES


@functools.partial(jax.jit, static_argnames=("tile_sublanes",))
def _forward_rows(x, w_hidden, b_hidden, w_out, b_out, *, tile_sublanes):
    """Module-semantics path: x [N, 2] -> [N, 3] (layout conversion under jit)."""
    n = x.shape[0]
    tile_rows = tile_sublanes * LANES
    n_pad = pl.cdiv(n, tile_rows) * tile_rows
    xt = jnp.transpose(x.astype(jnp.float32), (1, 0))          # [2, N]
    xt = jnp.pad(xt, ((0, 0), (0, n_pad - n)))                 # [2, n_pad]
    xt = xt.reshape(INPUT_SIZE, n_pad // LANES, LANES)         # channel-major
    out = _cppn_pallas_call(xt, w_hidden, b_hidden, w_out, b_out, tile_sublanes)
    out = out.reshape(OUTPUT_SIZE, n_pad)[:, :n]
    return jnp.transpose(out, (1, 0))                          # [N, 3]


@functools.partial(jax.jit, static_argnames=("tile_sublanes",))
def _forward_planes(x_planes, w_hidden, b_hidden, w_out, b_out, *, tile_sublanes):
    """Plumbing-free path: x_planes [2, R, 128] -> [3, R, 128]."""
    r = x_planes.shape[1]
    r_pad = pl.cdiv(r, tile_sublanes) * tile_sublanes
    if r_pad != r:
        x_planes = jnp.pad(x_planes, ((0, 0), (0, r_pad - r), (0, 0)))
    out = _cppn_pallas_call(x_planes.astype(jnp.float32),
                            w_hidden, b_hidden, w_out, b_out, tile_sublanes)
    return out[:, :r, :]


def cppn_forward(x, w_hidden, b_hidden, w_out, b_out,
                 *, max_tile_sublanes=MAX_TILE_SUBLANES):
    """Matches NN.forward: x [N, 2] f32 -> [N, 3] f32."""
    tile_sublanes = _pick_tile_sublanes(x.shape[0], max_tile_sublanes)
    return _forward_rows(x, w_hidden, b_hidden, w_out, b_out,
                         tile_sublanes=tile_sublanes)


def cppn_forward_channel_major(x_planes, w_hidden, b_hidden, w_out, b_out,
                               *, max_tile_sublanes=MAX_TILE_SUBLANES):
    """CPPN-image fast path with zero wrapper transposes: build the xx / yy
    coordinate planes directly as [2, R, 128] and get back [3, R, 128] (CHW)."""
    tile_sublanes = _pick_tile_sublanes(x_planes.shape[1] * LANES, max_tile_sublanes)
    return _forward_planes(x_planes, w_hidden, b_hidden, w_out, b_out,
                           tile_sublanes=tile_sublanes)


def params_from_torch(torch_weights, torch_biases):
    """Convert torch nn.Linear parameters ((out, in) weights) to the (in, out)
    layout this kernel expects. torch_weights/torch_biases: lists of 10 arrays."""
    w_hidden = jnp.stack([jnp.asarray(w, jnp.float32).T
                          for w in torch_weights[:N_LAYERS]])
    b_hidden = jnp.stack([jnp.asarray(b, jnp.float32)
                          for b in torch_biases[:N_LAYERS]])
    w_out = jnp.asarray(torch_weights[-1], jnp.float32).T
    b_out = jnp.asarray(torch_biases[-1], jnp.float32)
    return w_hidden, b_hidden, w_out, b_out


def init_params(key):
    """Synthetic init mirroring the module: weights ~ N(0,1) (nn.init.normal_),
    biases ~ U(-1/sqrt(fan_in), 1/sqrt(fan_in)) (torch Linear default).
    Weights are built directly in (in, out) order so the math is h @ W + b."""
    ks = jax.random.split(key, 4)
    w_hidden = jax.random.normal(ks[0], (N_LAYERS, N_NEURONS, N_NEURONS), jnp.float32)
    w_out = jax.random.normal(ks[1], (N_NEURONS, OUTPUT_SIZE), jnp.float32)
    bound_h = 1.0 / np.sqrt(N_NEURONS)
    b_hidden = jax.random.uniform(
        ks[2], (N_LAYERS, N_NEURONS), jnp.float32, -bound_h, bound_h)
    b_out = jax.random.uniform(
        ks[3], (OUTPUT_SIZE,), jnp.float32, -bound_h, bound_h)
    return w_hidden, b_hidden, w_out, b_out


def reference_forward(x, w_hidden, b_hidden, w_out, b_out):
    h = x.astype(jnp.float32)
    for l in range(N_LAYERS):
        h = jnp.tanh(h @ w_hidden[l] + b_hidden[l])
    return jax.nn.sigmoid(h @ w_out + b_out)


if __name__ == "__main__":
    key = jax.random.PRNGKey(0)
    k_x, k_p = jax.random.split(key)

    # CPPN-style input: a 256x256 coordinate grid flattened to [65536, 2]
    # -> tile of 256 sublanes (32768 rows) and an even grid of 2 steps
    #    (one per v7x TensorCore; a plain 2-step loop on v5e/v6e).
    side = 256
    coords = jnp.linspace(-1.0, 1.0, side, dtype=jnp.float32)
    yy, xx = jnp.meshgrid(coords, coords, indexing="ij")
    x = jnp.stack([xx.ravel(), yy.ravel()], axis=-1)           # [65536, 2]
    x = x + 0.01 * jax.random.normal(k_x, x.shape, jnp.float32)

    params = init_params(k_p)

    out = cppn_forward(x, *params)
    jax.block_until_ready(out)

    ref = reference_forward(x, *params)
    np.testing.assert_allclose(np.asarray(out), np.asarray(ref),
                               rtol=1e-4, atol=1e-4)

    print("KERNEL_OK")
</pallas_src>

<mosaic_0001>
module attributes {stable_mosaic.version = 11 : i64} {
  func.func @_cppn_kernel(%arg0: i32, %arg1: memref<36xf32, #tpu.memory_space<smem>>, %arg2: memref<18xf32, #tpu.memory_space<smem>>, %arg3: memref<6xf32, #tpu.memory_space<smem>>, %arg4: memref<3xf32, #tpu.memory_space<smem>>, %arg5: memref<2x256x128xf32, #tpu.memory_space<vmem>>, %arg6: memref<3x256x128xf32, #tpu.memory_space<vmem>>) attributes {dimension_semantics = [#tpu.dimension_semantics<parallel>], iteration_bounds = array<i64: 2>, scalar_prefetch = 4 : i64, scratch_operands = 0 : i64, tpu.core_type = #tpu.core_type<tc>, window_params = [{transform_indices = @transform_0, window_bounds = array<i64: 2, 256, 128>}, {transform_indices = @transform_1, window_bounds = array<i64: 3, 256, 128>}]} {
    %c0 = arith.constant 0 : index
    %0 = memref.load %arg1[%c0] : memref<36xf32, #tpu.memory_space<smem>>
    %c1 = arith.constant 1 : index
    %1 = memref.load %arg1[%c1] : memref<36xf32, #tpu.memory_space<smem>>
    %c2 = arith.constant 2 : index
    %2 = memref.load %arg1[%c2] : memref<36xf32, #tpu.memory_space<smem>>
    %c3 = arith.constant 3 : index
    %3 = memref.load %arg1[%c3] : memref<36xf32, #tpu.memory_space<smem>>
    %c4 = arith.constant 4 : index
    %4 = memref.load %arg1[%c4] : memref<36xf32, #tpu.memory_space<smem>>
    %c5 = arith.constant 5 : index
    %5 = memref.load %arg1[%c5] : memref<36xf32, #tpu.memory_space<smem>>
    %c6 = arith.constant 6 : index
    %6 = memref.load %arg1[%c6] : memref<36xf32, #tpu.memory_space<smem>>
    %c7 = arith.constant 7 : index
    %7 = memref.load %arg1[%c7] : memref<36xf32, #tpu.memory_space<smem>>
    %c8 = arith.constant 8 : index
    %8 = memref.load %arg1[%c8] : memref<36xf32, #tpu.memory_space<smem>>
    %c9 = arith.constant 9 : index
    %9 = memref.load %arg1[%c9] : memref<36xf32, #tpu.memory_space<smem>>
    %c10 = arith.constant 10 : index
    %10 = memref.load %arg1[%c10] : memref<36xf32, #tpu.memory_space<smem>>
    %c11 = arith.constant 11 : index
    %11 = memref.load %arg1[%c11] : memref<36xf32, #tpu.memory_space<smem>>
    %c12 = arith.constant 12 : index
    %12 = memref.load %arg1[%c12] : memref<36xf32, #tpu.memory_space<smem>>
    %c13 = arith.constant 13 : index
    %13 = memref.load %arg1[%c13] : memref<36xf32, #tpu.memory_space<smem>>
    %c14 = arith.constant 14 : index
    %14 = memref.load %arg1[%c14] : memref<36xf32, #tpu.memory_space<smem>>
    %c15 = arith.constant 15 : index
    %15 = memref.load %arg1[%c15] : memref<36xf32, #tpu.memory_space<smem>>
    %c16 = arith.constant 16 : index
    %16 = memref.load %arg1[%c16] : memref<36xf32, #tpu.memory_space<smem>>
    %c17 = arith.constant 17 : index
    %17 = memref.load %arg1[%c17] : memref<36xf32, #tpu.memory_space<smem>>
    %c18 = arith.constant 18 : index
    %18 = memref.load %arg1[%c18] : memref<36xf32, #tpu.memory_space<smem>>
    %c19 = arith.constant 19 : index
    %19 = memref.load %arg1[%c19] : memref<36xf32, #tpu.memory_space<smem>>
    %c20 = arith.constant 20 : index
    %20 = memref.load %arg1[%c20] : memref<36xf32, #tpu.memory_space<smem>>
    %c21 = arith.constant 21 : index
    %21 = memref.load %arg1[%c21] : memref<36xf32, #tpu.memory_space<smem>>
    %c22 = arith.constant 22 : index
    %22 = memref.load %arg1[%c22] : memref<36xf32, #tpu.memory_space<smem>>
    %c23 = arith.constant 23 : index
    %23 = memref.load %arg1[%c23] : memref<36xf32, #tpu.memory_space<smem>>
    %c24 = arith.constant 24 : index
    %24 = memref.load %arg1[%c24] : memref<36xf32, #tpu.memory_space<smem>>
    %c25 = arith.constant 25 : index
    %25 = memref.load %arg1[%c25] : memref<36xf32, #tpu.memory_space<smem>>
    %c26 = arith.constant 26 : index
    %26 = memref.load %arg1[%c26] : memref<36xf32, #tpu.memory_space<smem>>
    %c27 = arith.constant 27 : index
    %27 = memref.load %arg1[%c27] : memref<36xf32, #tpu.memory_space<smem>>
    %c28 = arith.constant 28 : index
    %28 = memref.load %arg1[%c28] : memref<36xf32, #tpu.memory_space<smem>>
    %c29 = arith.constant 29 : index
    %29 = memref.load %arg1[%c29] : memref<36xf32, #tpu.memory_space<smem>>
    %c30 = arith.constant 30 : index
    %30 = memref.load %arg1[%c30] : memref<36xf32, #tpu.memory_space<smem>>
    %c31 = arith.constant 31 : index
    %31 = memref.load %arg1[%c31] : memref<36xf32, #tpu.memory_space<smem>>
    %c32 = arith.constant 32 : index
    %32 = memref.load %arg1[%c32] : memref<36xf32, #tpu.memory_space<smem>>
    %c33 = arith.constant 33 : index
    %33 = memref.load %arg1[%c33] : memref<36xf32, #tpu.memory_space<smem>>
    %c34 = arith.constant 34 : index
    %34 = memref.load %arg1[%c34] : memref<36xf32, #tpu.memory_space<smem>>
    %c35 = arith.constant 35 : index
    %35 = memref.load %arg1[%c35] : memref<36xf32, #tpu.memory_space<smem>>
    %c0_0 = arith.constant 0 : index
    %36 = memref.load %arg2[%c0_0] : memref<18xf32, #tpu.memory_space<smem>>
    %c1_1 = arith.constant 1 : index
    %37 = memref.load %arg2[%c1_1] : memref<18xf32, #tpu.memory_space<smem>>
    %c2_2 = arith.constant 2 : index
    %38 = memref.load %arg2[%c2_2] : memref<18xf32, #tpu.memory_space<smem>>
    %c3_3 = arith.constant 3 : index
    %39 = memref.load %arg2[%c3_3] : memref<18xf32, #tpu.memory_space<smem>>
    %c4_4 = arith.constant 4 : index
    %40 = memref.load %arg2[%c4_4] : memref<18xf32, #tpu.memory_space<smem>>
    %c5_5 = arith.constant 5 : index
    %41 = memref.load %arg2[%c5_5] : memref<18xf32, #tpu.memory_space<smem>>
    %c6_6 = arith.constant 6 : index
    %42 = memref.load %arg2[%c6_6] : memref<18xf32, #tpu.memory_space<smem>>
    %c7_7 = arith.constant 7 : index
    %43 = memref.load %arg2[%c7_7] : memref<18xf32, #tpu.memory_space<smem>>
    %c8_8 = arith.constant 8 : index
    %44 = memref.load %arg2[%c8_8] : memref<18xf32, #tpu.memory_space<smem>>
    %c9_9 = arith.constant 9 : index
    %45 = memref.load %arg2[%c9_9] : memref<18xf32, #tpu.memory_space<smem>>
    %c10_10 = arith.constant 10 : index
    %46 = memref.load %arg2[%c10_10] : memref<18xf32, #tpu.memory_space<smem>>
    %c11_11 = arith.constant 11 : index
    %47 = memref.load %arg2[%c11_11] : memref<18xf32, #tpu.memory_space<smem>>
    %c12_12 = arith.constant 12 : index
    %48 = memref.load %arg2[%c12_12] : memref<18xf32, #tpu.memory_space<smem>>
    %c13_13 = arith.constant 13 : index
    %49 = memref.load %arg2[%c13_13] : memref<18xf32, #tpu.memory_space<smem>>
    %c14_14 = arith.constant 14 : index
    %50 = memref.load %arg2[%c14_14] : memref<18xf32, #tpu.memory_space<smem>>
    %c15_15 = arith.constant 15 : index
    %51 = memref.load %arg2[%c15_15] : memref<18xf32, #tpu.memory_space<smem>>
    %c16_16 = arith.constant 16 : index
    %52 = memref.load %arg2[%c16_16] : memref<18xf32, #tpu.memory_space<smem>>
    %c17_17 = arith.constant 17 : index
    %53 = memref.load %arg2[%c17_17] : memref<18xf32, #tpu.memory_space<smem>>
    %c0_18 = arith.constant 0 : index
    %54 = memref.load %arg3[%c0_18] : memref<6xf32, #tpu.memory_space<smem>>
    %c1_19 = arith.constant 1 : index
    %55 = memref.load %arg3[%c1_19] : memref<6xf32, #tpu.memory_space<smem>>
    %c2_20 = arith.constant 2 : index
    %56 = memref.load %arg3[%c2_20] : memref<6xf32, #tpu.memory_space<smem>>
    %c3_21 = arith.constant 3 : index
    %57 = memref.load %arg3[%c3_21] : memref<6xf32, #tpu.memory_space<smem>>
    %c4_22 = arith.constant 4 : index
    %58 = memref.load %arg3[%c4_22] : memref<6xf32, #tpu.memory_space<smem>>
    %c5_23 = arith.constant 5 : index
    %59 = memref.load %arg3[%c5_23] : memref<6xf32, #tpu.memory_space<smem>>
    %c0_24 = arith.constant 0 : index
    %60 = memref.load %arg4[%c0_24] : memref<3xf32, #tpu.memory_space<smem>>
    %c1_25 = arith.constant 1 : index
    %61 = memref.load %arg4[%c1_25] : memref<3xf32, #tpu.memory_space<smem>>
    %c2_26 = arith.constant 2 : index
    %62 = memref.load %arg4[%c2_26] : memref<3xf32, #tpu.memory_space<smem>>
    %c0_i32 = arith.constant 0 : i32
    %c4_i32 = arith.constant 4 : i32
    %63 = arith.addi %c0_i32, %c4_i32 : i32
    %c1_i32 = arith.constant 1 : i32
    scf.for %arg7 = %c0_i32 to %63 step %c1_i32  : i32 {
      %c64_i32 = arith.constant 64 : i32
      %64 = arith.muli %arg7, %c64_i32 : i32
      %65 = tpu.assume_multiple %64, 64 : i32
      %c0_28 = arith.constant 0 : index
      %66 = arith.index_cast %65 : i32 to index
      %c0_29 = arith.constant 0 : index
      %67 = vector.load %arg5[%c0_28, %66, %c0_29] : memref<2x256x128xf32, #tpu.memory_space<vmem>>, vector<1x64x128xf32>
      %68 = vector.shape_cast %67 : vector<1x64x128xf32> to vector<64x128xf32>
      %c1_30 = arith.constant 1 : index
      %69 = arith.index_cast %65 : i32 to index
      %c0_31 = arith.constant 0 : index
      %70 = vector.load %arg5[%c1_30, %69, %c0_31] : memref<2x256x128xf32, #tpu.memory_space<vmem>>, vector<1x64x128xf32>
      %71 = vector.shape_cast %70 : vector<1x64x128xf32> to vector<64x128xf32>
      %72 = vector.broadcast %0 : f32 to vector<64x128xf32>
      %73 = arith.mulf %68, %72 : vector<64x128xf32>
      %74 = vector.broadcast %2 : f32 to vector<64x128xf32>
      %75 = arith.mulf %71, %74 : vector<64x128xf32>
      %76 = arith.addf %73, %75 : vector<64x128xf32>
      %77 = vector.broadcast %36 : f32 to vector<64x128xf32>
      %78 = arith.addf %76, %77 : vector<64x128xf32>
      %79 = math.tanh %78 : vector<64x128xf32>
      %80 = vector.broadcast %1 : f32 to vector<64x128xf32>
      %81 = arith.mulf %68, %80 : vector<64x128xf32>
      %82 = vector.broadcast %3 : f32 to vector<64x128xf32>
      %83 = arith.mulf %71, %82 : vector<64x128xf32>
      %84 = arith.addf %81, %83 : vector<64x128xf32>
      %85 = vector.broadcast %37 : f32 to vector<64x128xf32>
      %86 = arith.addf %84, %85 : vector<64x128xf32>
      %87 = math.tanh %86 : vector<64x128xf32>
      %88 = vector.broadcast %4 : f32 to vector<64x128xf32>
      %89 = arith.mulf %79, %88 : vector<64x128xf32>
      %90 = vector.broadcast %6 : f32 to vector<64x128xf32>
      %91 = arith.mulf %87, %90 : vector<64x128xf32>
      %92 = arith.addf %89, %91 : vector<64x128xf32>
      %93 = vector.broadcast %38 : f32 to vector<64x128xf32>
      %94 = arith.addf %92, %93 : vector<64x128xf32>
      %95 = math.tanh %94 : vector<64x128xf32>
      %96 = vector.broadcast %5 : f32 to vector<64x128xf32>
      %97 = arith.mulf %79, %96 : vector<64x128xf32>
      %98 = vector.broadcast %7 : f32 to vector<64x128xf32>
      %99 = arith.mulf %87, %98 : vector<64x128xf32>
      %100 = arith.addf %97, %99 : vector<64x128xf32>
      %101 = vector.broadcast %39 : f32 to vector<64x128xf32>
      %102 = arith.addf %100, %101 : vector<64x128xf32>
      %103 = math.tanh %102 : vector<64x128xf32>
      %104 = vector.broadcast %8 : f32 to vector<64x128xf32>
      %105 = arith.mulf %95, %104 : vector<64x128xf32>
      %106 = vector.broadcast %10 : f32 to vector<64x128xf32>
      %107 = arith.mulf %103, %106 : vector<64x128xf32>
      %108 = arith.addf %105, %107 : vector<64x128xf32>
      %109 = vector.broadcast %40 : f32 to vector<64x128xf32>
      %110 = arith.addf %108, %109 : vector<64x128xf32>
      %111 = math.tanh %110 : vector<64x128xf32>
      %112 = vector.broadcast %9 : f32 to vector<64x128xf32>
      %113 = arith.mulf %95, %112 : vector<64x128xf32>
      %114 = vector.broadcast %11 : f32 to vector<64x128xf32>
      %115 = arith.mulf %103, %114 : vector<64x128xf32>
      %116 = arith.addf %113, %115 : vector<64x128xf32>
      %117 = vector.broadcast %41 : f32 to vector<64x128xf32>
      %118 = arith.addf %116, %117 : vector<64x128xf32>
      %119 = math.tanh %118 : vector<64x128xf32>
      %120 = vector.broadcast %12 : f32 to vector<64x128xf32>
      %121 = arith.mulf %111, %120 : vector<64x128xf32>
      %122 = vector.broadcast %14 : f32 to vector<64x128xf32>
      %123 = arith.mulf %119, %122 : vector<64x128xf32>
      %124 = arith.addf %121, %123 : vector<64x128xf32>
      %125 = vector.broadcast %42 : f32 to vector<64x128xf32>
      %126 = arith.addf %124, %125 : vector<64x128xf32>
      %127 = math.tanh %126 : vector<64x128xf32>
      %128 = vector.broadcast %13 : f32 to vector<64x128xf32>
      %129 = arith.mulf %111, %128 : vector<64x128xf32>
      %130 = vector.broadcast %15 : f32 to vector<64x128xf32>
      %131 = arith.mulf %119, %130 : vector<64x128xf32>
      %132 = arith.addf %129, %131 : vector<64x128xf32>
      %133 = vector.broadcast %43 : f32 to vector<64x128xf32>
      %134 = arith.addf %132, %133 : vector<64x128xf32>
      %135 = math.tanh %134 : vector<64x128xf32>
      %136 = vector.broadcast %16 : f32 to vector<64x128xf32>
      %137 = arith.mulf %127, %136 : vector<64x128xf32>
      %138 = vector.broadcast %18 : f32 to vector<64x128xf32>
      %139 = arith.mulf %135, %138 : vector<64x128xf32>
      %140 = arith.addf %137, %139 : vector<64x128xf32>
      %141 = vector.broadcast %44 : f32 to vector<64x128xf32>
      %142 = arith.addf %140, %141 : vector<64x128xf32>
      %143 = math.tanh %142 : vector<64x128xf32>
      %144 = vector.broadcast %17 : f32 to vector<64x128xf32>
      %145 = arith.mulf %127, %144 : vector<64x128xf32>
      %146 = vector.broadcast %19 : f32 to vector<64x128xf32>
      %147 = arith.mulf %135, %146 : vector<64x128xf32>
      %148 = arith.addf %145, %147 : vector<64x128xf32>
      %149 = vector.broadcast %45 : f32 to vector<64x128xf32>
      %150 = arith.addf %148, %149 : vector<64x128xf32>
      %151 = math.tanh %150 : vector<64x128xf32>
      %152 = vector.broadcast %20 : f32 to vector<64x128xf32>
      %153 = arith.mulf %143, %152 : vector<64x128xf32>
      %154 = vector.broadcast %22 : f32 to vector<64x128xf32>
      %155 = arith.mulf %151, %154 : vector<64x128xf32>
      %156 = arith.addf %153, %155 : vector<64x128xf32>
      %157 = vector.broadcast %46 : f32 to vector<64x128xf32>
      %158 = arith.addf %156, %157 : vector<64x128xf32>
      %159 = math.tanh %158 : vector<64x128xf32>
      %160 = vector.broadcast %21 : f32 to vector<64x128xf32>
      %161 = arith.mulf %143, %160 : vector<64x128xf32>
      %162 = vector.broadcast %23 : f32 to vector<64x128xf32>
      %163 = arith.mulf %151, %162 : vector<64x128xf32>
      %164 = arith.addf %161, %163 : vector<64x128xf32>
      %165 = vector.broadcast %47 : f32 to vector<64x128xf32>
      %166 = arith.addf %164, %165 : vector<64x128xf32>
      %167 = math.tanh %166 : vector<64x128xf32>
      %168 = vector.broadcast %24 : f32 to vector<64x128xf32>
      %169 = arith.mulf %159, %168 : vector<64x128xf32>
      %170 = vector.broadcast %26 : f32 to vector<64x128xf32>
      %171 = arith.mulf %167, %170 : vector<64x128xf32>
      %172 = arith.addf %169, %171 : vector<64x128xf32>
      %173 = vector.broadcast %48 : f32 to vector<64x128xf32>
      %174 = arith.addf %172, %173 : vector<64x128xf32>
      %175 = math.tanh %174 : vector<64x128xf32>
      %176 = vector.broadcast %25 : f32 to vector<64x128xf32>
      %177 = arith.mulf %159, %176 : vector<64x128xf32>
      %178 = vector.broadcast %27 : f32 to vector<64x128xf32>
      %179 = arith.mulf %167, %178 : vector<64x128xf32>
      %180 = arith.addf %177, %179 : vector<64x128xf32>
      %181 = vector.broadcast %49 : f32 to vector<64x128xf32>
      %182 = arith.addf %180, %181 : vector<64x128xf32>
      %183 = math.tanh %182 : vector<64x128xf32>
      %184 = vector.broadcast %28 : f32 to vector<64x128xf32>
      %185 = arith.mulf %175, %184 : vector<64x128xf32>
      %186 = vector.broadcast %30 : f32 to vector<64x128xf32>
      %187 = arith.mulf %183, %186 : vector<64x128xf32>
      %188 = arith.addf %185, %187 : vector<64x128xf32>
      %189 = vector.broadcast %50 : f32 to vector<64x128xf32>
      %190 = arith.addf %188, %189 : vector<64x128xf32>
      %191 = math.tanh %190 : vector<64x128xf32>
      %192 = vector.broadcast %29 : f32 to vector<64x128xf32>
      %193 = arith.mulf %175, %192 : vector<64x128xf32>
      %194 = vector.broadcast %31 : f32 to vector<64x128xf32>
      %195 = arith.mulf %183, %194 : vector<64x128xf32>
      %196 = arith.addf %193, %195 : vector<64x128xf32>
      %197 = vector.broadcast %51 : f32 to vector<64x128xf32>
      %198 = arith.addf %196, %197 : vector<64x128xf32>
      %199 = math.tanh %198 : vector<64x128xf32>
      %200 = vector.broadcast %32 : f32 to vector<64x128xf32>
      %201 = arith.mulf %191, %200 : vector<64x128xf32>
      %202 = vector.broadcast %34 : f32 to vector<64x128xf32>
      %203 = arith.mulf %199, %202 : vector<64x128xf32>
      %204 = arith.addf %201, %203 : vector<64x128xf32>
      %205 = vector.broadcast %52 : f32 to vector<64x128xf32>
      %206 = arith.addf %204, %205 : vector<64x128xf32>
      %207 = math.tanh %206 : vector<64x128xf32>
      %208 = vector.broadcast %33 : f32 to vector<64x128xf32>
      %209 = arith.mulf %191, %208 : vector<64x128xf32>
      %210 = vector.broadcast %35 : f32 to vector<64x128xf32>
      %211 = arith.mulf %199, %210 : vector<64x128xf32>
      %212 = arith.addf %209, %211 : vector<64x128xf32>
      %213 = vector.broadcast %53 : f32 to vector<64x128xf32>
      %214 = arith.addf %212, %213 : vector<64x128xf32>
      %215 = math.tanh %214 : vector<64x128xf32>
      %216 = vector.broadcast %54 : f32 to vector<64x128xf32>
      %217 = arith.mulf %207, %216 : vector<64x128xf32>
      %218 = vector.broadcast %57 : f32 to vector<64x128xf32>
      %219 = arith.mulf %215, %218 : vector<64x128xf32>
      %220 = arith.addf %217, %219 : vector<64x128xf32>
      %221 = vector.broadcast %60 : f32 to vector<64x128xf32>
      %222 = arith.addf %220, %221 : vector<64x128xf32>
      %cst = arith.constant 5.000000e-01 : f32
      %223 = vector.broadcast %cst : f32 to vector<64x128xf32>
      %224 = arith.mulf %223, %222 : vector<64x128xf32>
      %225 = math.tanh %224 : vector<64x128xf32>
      %cst_32 = arith.constant 5.000000e-01 : f32
      %226 = vector.broadcast %cst_32 : f32 to vector<64x128xf32>
      %227 = arith.mulf %226, %225 : vector<64x128xf32>
      %cst_33 = arith.constant 5.000000e-01 : f32
      %228 = vector.broadcast %cst_33 : f32 to vector<64x128xf32>
      %229 = arith.addf %227, %228 : vector<64x128xf32>
      %c0_34 = arith.constant 0 : index
      %230 = arith.index_cast %65 : i32 to index
      %c0_35 = arith.constant 0 : index
      %231 = vector.load %arg6[%c0_34, %230, %c0_35] : memref<3x256x128xf32, #tpu.memory_space<vmem>>, vector<1x64x128xf32>
      %232 = vector.shape_cast %231 : vector<1x64x128xf32> to vector<64x128xf32>
      %233 = vector.shape_cast %229 : vector<64x128xf32> to vector<1x64x128xf32>
      tpu.vector_store %arg6[%c0_34, %230, %c0_35], %233 {strides = array<i32>} : memref<3x256x128xf32, #tpu.memory_space<vmem>>, vector<1x64x128xf32>,
      %234 = vector.broadcast %55 : f32 to vector<64x128xf32>
      %235 = arith.mulf %207, %234 : vector<64x128xf32>
      %236 = vector.broadcast %58 : f32 to vector<64x128xf32>
      %237 = arith.mulf %215, %236 : vector<64x128xf32>
      %238 = arith.addf %235, %237 : vector<64x128xf32>
      %239 = vector.broadcast %61 : f32 to vector<64x128xf32>
      %240 = arith.addf %238, %239 : vector<64x128xf32>
      %cst_36 = arith.constant 5.000000e-01 : f32
      %241 = vector.broadcast %cst_36 : f32 to vector<64x128xf32>
      %242 = arith.mulf %241, %240 : vector<64x128xf32>
      %243 = math.tanh %242 : vector<64x128xf32>
      %cst_37 = arith.constant 5.000000e-01 : f32
      %244 = vector.broadcast %cst_37 : f32 to vector<64x128xf32>
      %245 = arith.mulf %244, %243 : vector<64x128xf32>
      %cst_38 = arith.constant 5.000000e-01 : f32
      %246 = vector.broadcast %cst_38 : f32 to vector<64x128xf32>
      %247 = arith.addf %245, %246 : vector<64x128xf32>
      %c1_39 = arith.constant 1 : index
      %248 = arith.index_cast %65 : i32 to index
      %c0_40 = arith.constant 0 : index
      %249 = vector.load %arg6[%c1_39, %248, %c0_40] : memref<3x256x128xf32, #tpu.memory_space<vmem>>, vector<1x64x128xf32>
      %250 = vector.shape_cast %249 : vector<1x64x128xf32> to vector<64x128xf32>
      %251 = vector.shape_cast %247 : vector<64x128xf32> to vector<1x64x128xf32>
      tpu.vector_store %arg6[%c1_39, %248, %c0_40], %251 {strides = array<i32>} : memref<3x256x128xf32, #tpu.memory_space<vmem>>, vector<1x64x128xf32>,
      %252 = vector.broadcast %56 : f32 to vector<64x128xf32>
      %253 = arith.mulf %207, %252 : vector<64x128xf32>
      %254 = vector.broadcast %59 : f32 to vector<64x128xf32>
      %255 = arith.mulf %215, %254 : vector<64x128xf32>
      %256 = arith.addf %253, %255 : vector<64x128xf32>
      %257 = vector.broadcast %62 : f32 to vector<64x128xf32>
      %258 = arith.addf %256, %257 : vector<64x128xf32>
      %cst_41 = arith.constant 5.000000e-01 : f32
      %259 = vector.broadcast %cst_41 : f32 to vector<64x128xf32>
      %260 = arith.mulf %259, %258 : vector<64x128xf32>
      %261 = math.tanh %260 : vector<64x128xf32>
      %cst_42 = arith.constant 5.000000e-01 : f32
      %262 = vector.broadcast %cst_42 : f32 to vector<64x128xf32>
      %263 = arith.mulf %262, %261 : vector<64x128xf32>
      %cst_43 = arith.constant 5.000000e-01 : f32
      %264 = vector.broadcast %cst_43 : f32 to vector<64x128xf32>
      %265 = arith.addf %263, %264 : vector<64x128xf32>
      %c2_44 = arith.constant 2 : index
      %266 = arith.index_cast %65 : i32 to index
      %c0_45 = arith.constant 0 : index
      %267 = vector.load %arg6[%c2_44, %266, %c0_45] : memref<3x256x128xf32, #tpu.memory_space<vmem>>, vector<1x64x128xf32>
      %268 = vector.shape_cast %267 : vector<1x64x128xf32> to vector<64x128xf32>
      %269 = vector.shape_cast %265 : vector<64x128xf32> to vector<1x64x128xf32>
      tpu.vector_store %arg6[%c2_44, %266, %c0_45], %269 {strides = array<i32>} : memref<3x256x128xf32, #tpu.memory_space<vmem>>, vector<1x64x128xf32>,
    }
    %c4_i32_27 = arith.constant 4 : i32
    return
  }
  func.func @transform_0(%arg0: i32, %arg1: memref<36xf32, #tpu.memory_space<smem>>, %arg2: memref<18xf32, #tpu.memory_space<smem>>, %arg3: memref<6xf32, #tpu.memory_space<smem>>, %arg4: memref<3xf32, #tpu.memory_space<smem>>) -> (i32, i32, i32) {
    %c0_i32 = arith.constant 0 : i32
    %c0_i32_0 = arith.constant 0 : i32
    %c0_i32_1 = arith.constant 0 : i32
    return %c0_i32, %arg0, %c0_i32_0 : i32, i32, i32
  }
  func.func @transform_1(%arg0: i32, %arg1: memref<36xf32, #tpu.memory_space<smem>>, %arg2: memref<18xf32, #tpu.memory_space<smem>>, %arg3: memref<6xf32, #tpu.memory_space<smem>>, %arg4: memref<3xf32, #tpu.memory_space<smem>>) -> (i32, i32, i32) {
    %c0_i32 = arith.constant 0 : i32
    %c0_i32_0 = arith.constant 0 : i32
    %c0_i32_1 = arith.constant 0 : i32
    return %c0_i32, %arg0, %c0_i32_0 : i32, i32, i32
  }
}

</mosaic_0001>

<llo_original>
// kernel: _forward_rows.1
$region0: #{_forward_rows.1}
  #allocation0 [shape = 'u32[]', space=smem, size = 0x4, offset = 0x4, fixed_abs, tag = 'smem constant byte address 0x4 - core index']
  #allocation1 [shape = 'u32[144,128]{1,0:T(1,128)}', space=vmem, size = 0x12000, scoped, tag = 'internal scratch']
  #allocation2 [shape = 's32[1]{0}', space=sflag, size = 0x4, scoped, tag = 'scoped memory for _forward_rows.1']
  #allocation3 [shape = 'u8[512]{0}', space=smem, size = 0x200, scoped, tag = 'prefetched SMEM operand 0']
  #allocation4 [shape = 'u8[512]{0}', space=smem, size = 0x200, scoped, tag = 'prefetched SMEM operand 1']
  #allocation5 [shape = 'u8[512]{0}', space=smem, size = 0x200, scoped, tag = 'prefetched SMEM operand 2']
  #allocation6 [shape = 'u8[512]{0}', space=smem, size = 0x200, scoped, tag = 'prefetched SMEM operand 3']
  %s0 = inlined_call_operand.vmem [shape: f32[36], index: 0, kind: input, shape index: {}]
  %s1 = inlined_call_operand.vmem [shape: f32[18], index: 1, kind: input, shape index: {}]
  %s2 = inlined_call_operand.vmem [shape: f32[6], index: 2, kind: input, shape index: {}]
  %s3 = inlined_call_operand.vmem [shape: f32[3], index: 3, kind: input, shape index: {}]
  %s4 = inlined_call_operand.vmem [shape: f32[2,512,128], index: 4, kind: input, shape index: {}]
  %s5 = inlined_call_operand.vmem [shape: f32[3,512,128], index: 5, kind: output, shape index: {}]
  %s6 = sld [smem:[#allocation0]]
  $region116: #{_forward_rows.1} parent=0
    _
  %s8 = ssub.s32 1, %s6
  %s9 = scalar_select 0, %s8, %s6
  %s10 = sshll.u32 %s0, 4
  %s11 = int_to_ptr.vmem [resolvable:$true] %s10
  %13 = dma.vmem_to_smem %s11, 16, [#allocation3], [#allocation2]
  %s14 = sshll.u32 %s1, 4
  %s15 = int_to_ptr.vmem [resolvable:$true] %s14
  %17 = dma.vmem_to_smem %s15, 16, [#allocation4], [#allocation2]
  %s18 = sshll.u32 %s2, 4
  %s19 = int_to_ptr.vmem [resolvable:$true] %s18
  %21 = dma.vmem_to_smem %s19, 16, [#allocation5], [#allocation2]
  %s22 = sshll.u32 %s3, 4
  %s23 = int_to_ptr.vmem [resolvable:$true] %s22
  %25 = dma.vmem_to_smem %s23, 16, [#allocation6], [#allocation2]
  %26 = dma.done [#allocation2], 64
  %27 = sfence
  $region1: #{_forward_rows.1} parent=0
    #allocation7 [shape = 'u8[524288]{0}', space=vmem, size = 0x80000, scoped, tag = 'input window, operand 4']
    #allocation8 [shape = 'u8[786432]{0}', space=vmem, size = 0xc0000, scoped, tag = 'output window, operand 0']
    loop: start=0, step=1, limit=4
    $region2: #{_forward_rows.1} parent=1 // loop_pre_header
      _
    $region3: #{_forward_rows.1} parent=1 // loop_header
      %s29 = sphi 0, %s33
      %p30 = scmp.ge.s32.totalorder %s29, 4
      %s39 = sphi 0, %s41
      %s42 = sphi 0, %s39
      %s43 = sphi 0, %s42
      %s59 = sphi 0, %s43
      %s65 = sphi 0, %s67
      %s68 = sphi 0, %s65
      %s69 = sphi 0, %s68
      %s85 = sphi 0, %s69
    $region4: #{_forward_rows.1} parent=1 // loop_header_branch
      %32 = sbr.rel (%p30) target = $region8
    $region5: #{_forward_rows.1} parent=1 // loop_body
      %s34 = ssub.s32 %s29, 1
      %s35 = ssub.s32 %s29, 2
      %s36 = sadd.s32 %s29, 1
      %s37 = ssub.s32 %s29, %s36
      %p38 = scmp.eq.s32.totalorder %s37, 0
      %s40 = sadd.s32 %s39, 1
      %s41 = scalar_select %p38, %s39, %s40
      %p44 = pneg %p38
      %p45 = scmp.eq.s32.totalorder %s29, 1
      %p46 = por %p44, %p45
      %p47 = scmp.ne.s32.totalorder %s39, %s42
      %p48 = scmp.eq.s32.totalorder %s29, 0
      %p49 = por %p47, %p48
      %p50 = scmp.ne.s32.totalorder %s39, %s42
      %p51 = scmp.eq.s32.totalorder %s34, 1
      %p52 = por %p50, %p51
      %p53 = scmp.ne.s32.totalorder %s42, %s43
      %p54 = scmp.eq.s32.totalorder %s34, 0
      %p55 = por %p53, %p54
      %p56 = scmp.ne.s32.totalorder %s42, %s43
      %p57 = scmp.eq.s32.totalorder %s35, 1
      %p58 = por %p56, %p57
      %p60 = scmp.ne.s32.totalorder %s43, %s59
      %p61 = scmp.eq.s32.totalorder %s35, 0
      %p62 = por %p60, %p61
      %s63 = ssub.s32 %s29, %s36
      %p64 = scmp.eq.s32.totalorder %s63, 0
      %s66 = sadd.s32 %s65, 1
      %s67 = scalar_select %p64, %s65, %s66
      %p70 = pneg %p64
      %p71 = scmp.eq.s32.totalorder %s29, 1
      %p72 = por %p70, %p71
      %p73 = scmp.ne.s32.totalorder %s65, %s68
      %p74 = scmp.eq.s32.totalorder %s29, 0
      %p75 = por %p73, %p74
      %p76 = scmp.ne.s32.totalorder %s65, %s68
      %p77 = scmp.eq.s32.totalorder %s34, 1
      %p78 = por %p76, %p77
      %p79 = scmp.ne.s32.totalorder %s68, %s69
      %p80 = scmp.eq.s32.totalorder %s34, 0
      %p81 = por %p79, %p80
      %p82 = scmp.ne.s32.totalorder %s68, %s69
      %p83 = scmp.eq.s32.totalorder %s35, 1
      %p84 = por %p82, %p83
      %p86 = scmp.ne.s32.totalorder %s69, %s85
      %p87 = scmp.eq.s32.totalorder %s35, 0
      %p88 = por %p86, %p87
      %p89 = scmp.le.s32.totalorder 1, %s29
      %p90 = scmp.lt.s32.totalorder %s29, 3
      %p91 = pnand %p89, %p90
      %p92 = pneg %p91
      // Predicated region
      $region9: #{_forward_rows.1} parent=5 // pred_check
        _
      $region10: #{_forward_rows.1} parent=5 // pred_check_branch
        %94 = sbr.rel (%p91) target = $region12
      $region11: #{_forward_rows.1} parent=5 // pred_region
        %s95 = ssub.s32 %s29, 1
      $region12: #{_forward_rows.1} parent=5 // pred_fallthru
        _
      %p96 = scmp.lt.s32.totalorder %s29, 2
      // Predicated region
      $region13: #{_forward_rows.1} parent=5 // pred_check
        %p97 = pneg %p96
      $region14: #{_forward_rows.1} parent=5 // pred_check_branch
        %99 = sbr.rel (%p97) target = $region16
      $region15: #{_forward_rows.1} parent=5 // pred_region
        // Predicated region
        $region17: #{_forward_rows.1} parent=15 // pred_check
          %p100 = pneg %p49
        $region18: #{_forward_rows.1} parent=15 // pred_check_branch
          %102 = sbr.rel (%p100) target = $region20
        $region19: #{_forward_rows.1} parent=15 // pred_region
          %s103 = sand.u32 %s39, 1
          %s104 = sand.u32 %s39, 1
          %s105 = smul.addr %s104, 512
          %s106 = scalar_lea.vmem [#allocation7], %s105
          %s107 = smul.u32 32, %s29
          %s108 = smul.addr %s107, 8
          %s109 = scalar_lea.vmem %s4, %s108
          // Predicated region
          $region21: #{_forward_rows.1} parent=19 // pred_check
            _
          $region22: #{_forward_rows.1} parent=19 // pred_check_branch
            %111 = sbr.rel (0) target = $region24
          $region23: #{_forward_rows.1} parent=19 // pred_region
            // Predicated region
            $region25: #{_forward_rows.1} parent=23 // pred_check
              _
            $region26: #{_forward_rows.1} parent=23 // pred_check_branch
              %113 = sbr.rel (0) target = $region28
            $region27: #{_forward_rows.1} parent=23 // pred_region
              // Predicated region
              $region40: #{_forward_rows.1} parent=27 // pred_check
                _
              $region41: #{_forward_rows.1} parent=27 // pred_check_branch
                %254 = sbr.rel (0) target = $region43
              $region42: #{_forward_rows.1} parent=27 // pred_region
                loop: start=0, step=1, limit=1
                $region44: #{_forward_rows.1} parent=42 // loop_pre_header
                  _
                $region45: #{_forward_rows.1} parent=42 // loop_header
                  %s256 = sphi 0, %s260
                  %p257 = scmp.ge.s32.totalorder %s256, 1
                  %s261 = sphi %s109, %s109
                  %s262 = sphi %s106, %s106
                $region46: #{_forward_rows.1} parent=42 // loop_header_branch
                  %259 = sbr.rel (%p257) target = $region50
                $region47: #{_forward_rows.1} parent=42 // loop_body
                  %v263 = vld [vmem:[%s261] sm:$0xff]
                  %264 = vst [vmem:[%s262] sm:$0xff] %v263
                  %v265 = vld [vmem:[%s261 + $0x8] sm:$0xff]
                  %266 = vst [vmem:[%s262 + $0x8] sm:$0xff] %v265
                  %v267 = vld [vmem:[%s261 + $0x10] sm:$0xff]
                  %268 = vst [vmem:[%s262 + $0x10] sm:$0xff] %v267
                  %v269 = vld [vmem:[%s261 + $0x18] sm:$0xff]
                  %270 = vst [vmem:[%s262 + $0x18] sm:$0xff] %v269
                  %v271 = vld [vmem:[%s261 + $0x20] sm:$0xff]
                  %272 = vst [vmem:[%s262 + $0x20] sm:$0xff] %v271
                  %v273 = vld [vmem:[%s261 + $0x28] sm:$0xff]
                  %274 = vst [vmem:[%s262 + $0x28] sm:$0xff] %v273
                  %v275 = vld [vmem:[%s261 + $0x30] sm:$0xff]
                  %276 = vst [vmem:[%s262 + $0x30] sm:$0xff] %v275
                  %v277 = vld [vmem:[%s261 + $0x38] sm:$0xff]
                  %278 = vst [vmem:[%s262 + $0x38] sm:$0xff] %v277
                  %v279 = vld [vmem:[%s261 + $0x40] sm:$0xff]
                  %280 = vst [vmem:[%s262 + $0x40] sm:$0xff] %v279
                  %v281 = vld [vmem:[%s261 + $0x48] sm:$0xff]
                  %282 = vst [vmem:[%s262 + $0x48] sm:$0xff] %v281
                  %v283 = vld [vmem:[%s261 + $0x50] sm:$0xff]
                  %284 = vst [vmem:[%s262 + $0x50] sm:$0xff] %v283
                  %v285 = vld [vmem:[%s261 + $0x58] sm:$0xff]
                  %286 = vst [vmem:[%s262 + $0x58] sm:$0xff] %v285
                  %v287 = vld [vmem:[%s261 + $0x60] sm:$0xff]
                  %288 = vst [vmem:[%s262 + $0x60] sm:$0xff] %v287
                  %v289 = vld [vmem:[%s261 + $0x68] sm:$0xff]
                  %290 = vst [vmem:[%s262 + $0x68] sm:$0xff] %v289
                  %v291 = vld [vmem:[%s261 + $0x70] sm:$0xff]
                  %292 = vst [vmem:[%s262 + $0x70] sm:$0xff] %v291
                  %v293 = vld [vmem:[%s261 + $0x78] sm:$0xff]
                  %294 = vst [vmem:[%s262 + $0x78] sm:$0xff] %v293
                  %v295 = vld [vmem:[%s261 + $0x80] sm:$0xff]
                  %296 = vst [vmem:[%s262 + $0x80] sm:$0xff] %v295
                  %v297 = vld [vmem:[%s261 + $0x88] sm:$0xff]
                  %298 = vst [vmem:[%s262 + $0x88] sm:$0xff] %v297
                  %v299 = vld [vmem:[%s261 + $0x90] sm:$0xff]
                  %300 = vst [vmem:[%s262 + $0x90] sm:$0xff] %v299
                  %v301 = vld [vmem:[%s261 + $0x98] sm:$0xff]
                  %302 = vst [vmem:[%s262 + $0x98] sm:$0xff] %v301
                  %v303 = vld [vmem:[%s261 + $0xa0] sm:$0xff]
                  %304 = vst [vmem:[%s262 + $0xa0] sm:$0xff] %v303
                  %v305 = vld [vmem:[%s261 + $0xa8] sm:$0xff]
                  %306 = vst [vmem:[%s262 + $0xa8] sm:$0xff] %v305
                  %v307 = vld [vmem:[%s261 + $0xb0] sm:$0xff]
                  %308 = vst [vmem:[%s262 + $0xb0] sm:$0xff] %v307
                  %v309 = vld [vmem:[%s261 + $0xb8] sm:$0xff]
                  %310 = vst [vmem:[%s262 + $0xb8] sm:$0xff] %v309
                  %v311 = vld [vmem:[%s261 + $0xc0] sm:$0xff]
                  %312 = vst [vmem:[%s262 + $0xc0] sm:$0xff] %v311
                  %v313 = vld [vmem:[%s261 + $0xc8] sm:$0xff]
                  %314 = vst [vmem:[%s262 + $0xc8] sm:$0xff] %v313
                  %v315 = vld [vmem:[%s261 + $0xd0] sm:$0xff]
                  %316 = vst [vmem:[%s262 + $0xd0] sm:$0xff] %v315
                  %v317 = vld [vmem:[%s261 + $0xd8] sm:$0xff]
                  %318 = vst [vmem:[%s262 + $0xd8] sm:$0xff] %v317
                  %v319 = vld [vmem:[%s261 + $0xe0] sm:$0xff]
                  %320 = vst [vmem:[%s262 + $0xe0] sm:$0xff] %v319
                  %v321 = vld [vmem:[%s261 + $0xe8] sm:$0xff]
                  %322 = vst [vmem:[%s262 + $0xe8] sm:$0xff] %v321
                  %v323 = vld [vmem:[%s261 + $0xf0] sm:$0xff]
                  %324 = vst [vmem:[%s262 + $0xf0] sm:$0xff] %v323
                  %v325 = vld [vmem:[%s261 + $0xf8] sm:$0xff]
                  %326 = vst [vmem:[%s262 + $0xf8] sm:$0xff] %v325
                  %v327 = vld [vmem:[%s261 + $0x200] sm:$0xff]
                  %328 = vst [vmem:[%s262 + $0x100] sm:$0xff] %v327
                  %v329 = vld [vmem:[%s261 + $0x208] sm:$0xff]
                  %330 = vst [vmem:[%s262 + $0x108] sm:$0xff] %v329
                  %v331 = vld [vmem:[%s261 + $0x210] sm:$0xff]
                  %332 = vst [vmem:[%s262 + $0x110] sm:$0xff] %v331
                  %v333 = vld [vmem:[%s261 + $0x218] sm:$0xff]
                  %334 = vst [vmem:[%s262 + $0x118] sm:$0xff] %v333
                  %v335 = vld [vmem:[%s261 + $0x220] sm:$0xff]
                  %336 = vst [vmem:[%s262 + $0x120] sm:$0xff] %v335
                  %v337 = vld [vmem:[%s261 + $0x228] sm:$0xff]
                  %338 = vst [vmem:[%s262 + $0x128] sm:$0xff] %v337
                  %v339 = vld [vmem:[%s261 + $0x230] sm:$0xff]
                  %340 = vst [vmem:[%s262 + $0x130] sm:$0xff] %v339
                  %v341 = vld [vmem:[%s261 + $0x238] sm:$0xff]
                  %342 = vst [vmem:[%s262 + $0x138] sm:$0xff] %v341
                  %v343 = vld [vmem:[%s261 + $0x240] sm:$0xff]
                  %344 = vst [vmem:[%s262 + $0x140] sm:$0xff] %v343
                  %v345 = vld [vmem:[%s261 + $0x248] sm:$0xff]
                  %346 = vst [vmem:[%s262 + $0x148] sm:$0xff] %v345
                  %v347 = vld [vmem:[%s261 + $0x250] sm:$0xff]
                  %348 = vst [vmem:[%s262 + $0x150] sm:$0xff] %v347
                  %v349 = vld [vmem:[%s261 + $0x258] sm:$0xff]
                  %350 = vst [vmem:[%s262 + $0x158] sm:$0xff] %v349
                  %v351 = vld [vmem:[%s261 + $0x260] sm:$0xff]
                  %352 = vst [vmem:[%s262 + $0x160] sm:$0xff] %v351
                  %v353 = vld [vmem:[%s261 + $0x268] sm:$0xff]
                  %354 = vst [vmem:[%s262 + $0x168] sm:$0xff] %v353
                  %v355 = vld [vmem:[%s261 + $0x270] sm:$0xff]
                  %356 = vst [vmem:[%s262 + $0x170] sm:$0xff] %v355
                  %v357 = vld [vmem:[%s261 + $0x278] sm:$0xff]
                  %358 = vst [vmem:[%s262 + $0x178] sm:$0xff] %v357
                  %v359 = vld [vmem:[%s261 + $0x280] sm:$0xff]
                  %360 = vst [vmem:[%s262 + $0x180] sm:$0xff] %v359
                  %v361 = vld [vmem:[%s261 + $0x288] sm:$0xff]
                  %362 = vst [vmem:[%s262 + $0x188] sm:$0xff] %v361
                  %v363 = vld [vmem:[%s261 + $0x290] sm:$0xff]
                  %364 = vst [vmem:[%s262 + $0x190] sm:$0xff] %v363
                  %v365 = vld [vmem:[%s261 + $0x298] sm:$0xff]
                  %366 = vst [vmem:[%s262 + $0x198] sm:$0xff] %v365
                  %v367 = vld [vmem:[%s261 + $0x2a0] sm:$0xff]
                  %368 = vst [vmem:[%s262 + $0x1a0] sm:$0xff] %v367
                  %v369 = vld [vmem:[%s261 + $0x2a8] sm:$0xff]
                  %370 = vst [vmem:[%s262 + $0x1a8] sm:$0xff] %v369
                  %v371 = vld [vmem:[%s261 + $0x2b0] sm:$0xff]
                  %372 = vst [vmem:[%s262 + $0x1b0] sm:$0xff] %v371
                  %v373 = vld [vmem:[%s261 + $0x2b8] sm:$0xff]
                  %374 = vst [vmem:[%s262 + $0x1b8] sm:$0xff] %v373
                  %v375 = vld [vmem:[%s261 + $0x2c0] sm:$0xff]
                  %376 = vst [vmem:[%s262 + $0x1c0] sm:$0xff] %v375
                  %v377 = vld [vmem:[%s261 + $0x2c8] sm:$0xff]
                  %378 = vst [vmem:[%s262 + $0x1c8] sm:$0xff] %v377
                  %v379 = vld [vmem:[%s261 + $0x2d0] sm:$0xff]
                  %380 = vst [vmem:[%s262 + $0x1d0] sm:$0xff] %v379
                  %v381 = vld [vmem:[%s261 + $0x2d8] sm:$0xff]
                  %382 = vst [vmem:[%s262 + $0x1d8] sm:$0xff] %v381
                  %v383 = vld [vmem:[%s261 + $0x2e0] sm:$0xff]
                  %384 = vst [vmem:[%s262 + $0x1e0] sm:$0xff] %v383
                  %v385 = vld [vmem:[%s261 + $0x2e8] sm:$0xff]
                  %386 = vst [vmem:[%s262 + $0x1e8] sm:$0xff] %v385
                  %v387 = vld [vmem:[%s261 + $0x2f0] sm:$0xff]
                  %388 = vst [vmem:[%s262 + $0x1f0] sm:$0xff] %v387
                  %v389 = vld [vmem:[%s261 + $0x2f8] sm:$0xff]
                  %390 = vst [vmem:[%s262 + $0x1f8] sm:$0xff] %v389
                $region48: #{_forward_rows.1} parent=42 // loop_footer
                  %s260 = sadd.s32 1, %s256
                $region49: #{_forward_rows.1} parent=42 // loop_footer_branch
                  %255 = sbr.rel target = $region45
                $region50: #{_forward_rows.1} parent=42 // loop_exit
                  _
              $region43: #{_forward_rows.1} parent=27 // pred_fallthru
                _
              // Predicated region
              $region51: #{_forward_rows.1} parent=27 // pred_check
                _
              $region52: #{_forward_rows.1} parent=27 // pred_check_branch
                %392 = sbr.rel target = $region54
              $region53: #{_forward_rows.1} parent=27 // pred_region
                _
              $region54: #{_forward_rows.1} parent=27 // pred_fallthru
                _
            $region28: #{_forward_rows.1} parent=23 // pred_fallthru
              _
            // Predicated region
            $region29: #{_forward_rows.1} parent=23 // pred_check
              _
            $region30: #{_forward_rows.1} parent=23 // pred_check_branch
              %115 = sbr.rel target = $region32
            $region31: #{_forward_rows.1} parent=23 // pred_region
              loop: start=0, step=1, limit=1
              $region33: #{_forward_rows.1} parent=31 // loop_pre_header
                _
              $region34: #{_forward_rows.1} parent=31 // loop_header
                %s118 = sphi 0, %s122
                %p119 = scmp.ge.s32.totalorder %s118, 1
                %s123 = sphi %s109, %s109
                %s124 = sphi %s106, %s106
              $region35: #{_forward_rows.1} parent=31 // loop_header_branch
                %121 = sbr.rel (%p119) target = $region39
              $region36: #{_forward_rows.1} parent=31 // loop_body
                %v125 = vld [vmem:[%s123] sm:$0xff]
                %126 = vst [vmem:[%s124] sm:$0xff] %v125
                %v127 = vld [vmem:[%s123 + $0x8] sm:$0xff]
                %128 = vst [vmem:[%s124 + $0x8] sm:$0xff] %v127
                %v129 = vld [vmem:[%s123 + $0x10] sm:$0xff]
                %130 = vst [vmem:[%s124 + $0x10] sm:$0xff] %v129
                %v131 = vld [vmem:[%s123 + $0x18] sm:$0xff]
                %132 = vst [vmem:[%s124 + $0x18] sm:$0xff] %v131
                %v133 = vld [vmem:[%s123 + $0x20] sm:$0xff]
                %134 = vst [vmem:[%s124 + $0x20] sm:$0xff] %v133
                %v135 = vld [vmem:[%s123 + $0x28] sm:$0xff]
                %136 = vst [vmem:[%s124 + $0x28] sm:$0xff] %v135
                %v137 = vld [vmem:[%s123 + $0x30] sm:$0xff]
                %138 = vst [vmem:[%s124 + $0x30] sm:$0xff] %v137
                %v139 = vld [vmem:[%s123 + $0x38] sm:$0xff]
                %140 = vst [vmem:[%s124 + $0x38] sm:$0xff] %v139
                %v141 = vld [vmem:[%s123 + $0x40] sm:$0xff]
                %142 = vst [vmem:[%s124 + $0x40] sm:$0xff] %v141
                %v143 = vld [vmem:[%s123 + $0x48] sm:$0xff]
                %144 = vst [vmem:[%s124 + $0x48] sm:$0xff] %v143
                %v145 = vld [vmem:[%s123 + $0x50] sm:$0xff]
                %146 = vst [vmem:[%s124 + $0x50] sm:$0xff] %v145
                %v147 = vld [vmem:[%s123 + $0x58] sm:$0xff]
                %148 = vst [vmem:[%s124 + $0x58] sm:$0xff] %v147
                %v149 = vld [vmem:[%s123 + $0x60] sm:$0xff]
                %150 = vst [vmem:[%s124 + $0x60] sm:$0xff] %v149
                %v151 = vld [vmem:[%s123 + $0x68] sm:$0xff]
                %152 = vst [vmem:[%s124 + $0x68] sm:$0xff] %v151
                %v153 = vld [vmem:[%s123 + $0x70] sm:$0xff]
                %154 = vst [vmem:[%s124 + $0x70] sm:$0xff] %v153
                %v155 = vld [vmem:[%s123 + $0x78] sm:$0xff]
                %156 = vst [vmem:[%s124 + $0x78] sm:$0xff] %v155
                %v157 = vld [vmem:[%s123 + $0x80] sm:$0xff]
                %158 = vst [vmem:[%s124 + $0x80] sm:$0xff] %v157
                %v159 = vld [vmem:[%s123 + $0x88] sm:$0xff]
                %160 = vst [vmem:[%s124 + $0x88] sm:$0xff] %v159
                %v161 = vld [vmem:[%s123 + $0x90] sm:$0xff]
                %162 = vst [vmem:[%s124 + $0x90] sm:$0xff] %v161
                %v163 = vld [vmem:[%s123 + $0x98] sm:$0xff]
                %164 = vst [vmem:[%s124 + $0x98] sm:$0xff] %v163
                %v165 = vld [vmem:[%s123 + $0xa0] sm:$0xff]
                %166 = vst [vmem:[%s124 + $0xa0] sm:$0xff] %v165
                %v167 = vld [vmem:[%s123 + $0xa8] sm:$0xff]
                %168 = vst [vmem:[%s124 + $0xa8] sm:$0xff] %v167
                %v169 = vld [vmem:[%s123 + $0xb0] sm:$0xff]
                %170 = vst [vmem:[%s124 + $0xb0] sm:$0xff] %v169
                %v171 = vld [vmem:[%s123 + $0xb8] sm:$0xff]
                %172 = vst [vmem:[%s124 + $0xb8] sm:$0xff] %v171
                %v173 = vld [vmem:[%s123 + $0xc0] sm:$0xff]
                %174 = vst [vmem:[%s124 + $0xc0] sm:$0xff] %v173
                %v175 = vld [vmem:[%s123 + $0xc8] sm:$0xff]
                %176 = vst [vmem:[%s124 + $0xc8] sm:$0xff] %v175
                %v177 = vld [vmem:[%s123 + $0xd0] sm:$0xff]
                %178 = vst [vmem:[%s124 + $0xd0] sm:$0xff] %v177
                %v179 = vld [vmem:[%s123 + $0xd8] sm:$0xff]
                %180 = vst [vmem:[%s124 + $0xd8] sm:$0xff] %v179
                %v181 = vld [vmem:[%s123 + $0xe0] sm:$0xff]
                %182 = vst [vmem:[%s124 + $0xe0] sm:$0xff] %v181
                %v183 = vld [vmem:[%s123 + $0xe8] sm:$0xff]
                %184 = vst [vmem:[%s124 + $0xe8] sm:$0xff] %v183
                %v185 = vld [vmem:[%s123 + $0xf0] sm:$0xff]
                %186 = vst [vmem:[%s124 + $0xf0] sm:$0xff] %v185
                %v187 = vld [vmem:[%s123 + $0xf8] sm:$0xff]
                %188 = vst [vmem:[%s124 + $0xf8] sm:$0xff] %v187
                %v189 = vld [vmem:[%s123 + $0x200] sm:$0xff]
                %190 = vst [vmem:[%s124 + $0x100] sm:$0xff] %v189
                %v191 = vld [vmem:[%s123 + $0x208] sm:$0xff]
                %192 = vst [vmem:[%s124 + $0x108] sm:$0xff] %v191
                %v193 = vld [vmem:[%s123 + $0x210] sm:$0xff]
                %194 = vst [vmem:[%s124 + $0x110] sm:$0xff] %v193
                %v195 = vld [vmem:[%s123 + $0x218] sm:$0xff]
                %196 = vst [vmem:[%s124 + $0x118] sm:$0xff] %v195
                %v197 = vld [vmem:[%s123 + $0x220] sm:$0xff]
                %198 = vst [vmem:[%s124 + $0x120] sm:$0xff] %v197
                %v199 = vld [vmem:[%s123 + $0x228] sm:$0xff]
                %200 = vst [vmem:[%s124 + $0x128] sm:$0xff] %v199
                %v201 = vld [vmem:[%s123 + $0x230] sm:$0xff]
                %202 = vst [vmem:[%s124 + $0x130] sm:$0xff] %v201
                %v203 = vld [vmem:[%s123 + $0x238] sm:$0xff]
                %204 = vst [vmem:[%s124 + $0x138] sm:$0xff] %v203
                %v205 = vld [vmem:[%s123 + $0x240] sm:$0xff]
                %206 = vst [vmem:[%s124 + $0x140] sm:$0xff] %v205
                %v207 = vld [vmem:[%s123 + $0x248] sm:$0xff]
                %208 = vst [vmem:[%s124 + $0x148] sm:$0xff] %v207
                %v209 = vld [vmem:[%s123 + $0x250] sm:$0xff]
                %210 = vst [vmem:[%s124 + $0x150] sm:$0xff] %v209
                %v211 = vld [vmem:[%s123 + $0x258] sm:$0xff]
                %212 = vst [vmem:[%s124 + $0x158] sm:$0xff] %v211
                %v213 = vld [vmem:[%s123 + $0x260] sm:$0xff]
                %214 = vst [vmem:[%s124 + $0x160] sm:$0xff] %v213
                %v215 = vld [vmem:[%s123 + $0x268] sm:$0xff]
                %216 = vst [vmem:[%s124 + $0x168] sm:$0xff] %v215
                %v217 = vld [vmem:[%s123 + $0x270] sm:$0xff]
                %218 = vst [vmem:[%s124 + $0x170] sm:$0xff] %v217
                %v219 = vld [vmem:[%s123 + $0x278] sm:$0xff]
                %220 = vst [vmem:[%s124 + $0x178] sm:$0xff] %v219
                %v221 = vld [vmem:[%s123 + $0x280] sm:$0xff]
                %222 = vst [vmem:[%s124 + $0x180] sm:$0xff] %v221
                %v223 = vld [vmem:[%s123 + $0x288] sm:$0xff]
                %224 = vst [vmem:[%s124 + $0x188] sm:$0xff] %v223
                %v225 = vld [vmem:[%s123 + $0x290] sm:$0xff]
                %226 = vst [vmem:[%s124 + $0x190] sm:$0xff] %v225
                %v227 = vld [vmem:[%s123 + $0x298] sm:$0xff]
                %228 = vst [vmem:[%s124 + $0x198] sm:$0xff] %v227
                %v229 = vld [vmem:[%s123 + $0x2a0] sm:$0xff]
                %230 = vst [vmem:[%s124 + $0x1a0] sm:$0xff] %v229
                %v231 = vld [vmem:[%s123 + $0x2a8] sm:$0xff]
                %232 = vst [vmem:[%s124 + $0x1a8] sm:$0xff] %v231
                %v233 = vld [vmem:[%s123 + $0x2b0] sm:$0xff]
                %234 = vst [vmem:[%s124 + $0x1b0] sm:$0xff] %v233
                %v235 = vld [vmem:[%s123 + $0x2b8] sm:$0xff]
                %236 = vst [vmem:[%s124 + $0x1b8] sm:$0xff] %v235
                %v237 = vld [vmem:[%s123 + $0x2c0] sm:$0xff]
                %238 = vst [vmem:[%s124 + $0x1c0] sm:$0xff] %v237
                %v239 = vld [vmem:[%s123 + $0x2c8] sm:$0xff]
                %240 = vst [vmem:[%s124 + $0x1c8] sm:$0xff] %v239
                %v241 = vld [vmem:[%s123 + $0x2d0] sm:$0xff]
                %242 = vst [vmem:[%s124 + $0x1d0] sm:$0xff] %v241
                %v243 = vld [vmem:[%s123 + $0x2d8] sm:$0xff]
                %244 = vst [vmem:[%s124 + $0x1d8] sm:$0xff] %v243
                %v245 = vld [vmem:[%s123 + $0x2e0] sm:$0xff]
                %246 = vst [vmem:[%s124 + $0x1e0] sm:$0xff] %v245
                %v247 = vld [vmem:[%s123 + $0x2e8] sm:$0xff]
                %248 = vst [vmem:[%s124 + $0x1e8] sm:$0xff] %v247
                %v249 = vld [vmem:[%s123 + $0x2f0] sm:$0xff]
                %250 = vst [vmem:[%s124 + $0x1f0] sm:$0xff] %v249
                %v251 = vld [vmem:[%s123 + $0x2f8] sm:$0xff]
                %252 = vst [vmem:[%s124 + $0x1f8] sm:$0xff] %v251
              $region37: #{_forward_rows.1} parent=31 // loop_footer
                %s122 = sadd.s32 1, %s118
              $region38: #{_forward_rows.1} parent=31 // loop_footer_branch
                %117 = sbr.rel target = $region34
              $region39: #{_forward_rows.1} parent=31 // loop_exit
                _
            $region32: #{_forward_rows.1} parent=23 // pred_fallthru
              _
          $region24: #{_forward_rows.1} parent=19 // pred_fallthru
            _
          %393 = vnop
        $region20: #{_forward_rows.1} parent=15 // pred_fallthru
          _
      $region16: #{_forward_rows.1} parent=5 // pred_fallthru
        _
      %p394 = scmp.le.s32.totalorder 1, %s29
      %p395 = scmp.lt.s32.totalorder %s29, 3
      %p396 = pnand %p394, %p395
      %p397 = pneg %p396
      // Predicated region
      $region55: #{_forward_rows.1} parent=5 // pred_check
        _
      $region56: #{_forward_rows.1} parent=5 // pred_check_branch
        %399 = sbr.rel (%p396) target = $region58
      $region57: #{_forward_rows.1} parent=5 // pred_region
        %s400 = ssub.s32 %s29, 1
        %s401 = sand.u32 %s42, 1
        %s402 = sand.u32 %s42, 1
        %s403 = smul.addr %s402, 512
        %s404 = scalar_lea.vmem [#allocation7], %s403
        // Predicated region
        $region59: #{_forward_rows.1} parent=57 // pred_check
          %p405 = pneg %p55
        $region60: #{_forward_rows.1} parent=57 // pred_check_branch
          %407 = sbr.rel (%p405) target = $region62
        $region61: #{_forward_rows.1} parent=57 // pred_region
          _
        $region62: #{_forward_rows.1} parent=57 // pred_fallthru
          _
        %s408 = sand.u32 %s42, 1
        %s409 = sand.u32 %s42, 1
        %s410 = smul.addr %s409, 512
        %s411 = scalar_lea.vmem [#allocation7], %s410
        %p412 = pneg %p55
        %p413 = pneg %p52
        %p414 = pneg %p81
        %p415 = pneg %p78
        %s416 = sand.u32 %s68, 1
        %s417 = sand.u32 %s68, 1
        %s418 = smul.addr %s417, 768
        %s419 = scalar_lea.vmem [#allocation8], %s418
        %s420 = smul.u32 32, %s34
        %s421 = smul.u32 32, %s34
        %s422 = sld [smem:[#allocation3]]
        %s423 = sld [smem:[#allocation3 + $0x1]]
        %s424 = sld [smem:[#allocation3 + $0x2]]
        %s425 = sld [smem:[#allocation3 + $0x3]]
        %s426 = sld [smem:[#allocation3 + $0x4]]
        %s427 = sld [smem:[#allocation3 + $0x5]]
        %s428 = sld [smem:[#allocation3 + $0x6]]
        %s429 = sld [smem:[#allocation3 + $0x7]]
        %s430 = sld [smem:[#allocation3 + $0x8]]
        %s431 = sld [smem:[#allocation3 + $0x9]]
        %s432 = sld [smem:[#allocation3 + $0xa]]
        %s433 = sld [smem:[#allocation3 + $0xb]]
        %s434 = sld [smem:[#allocation3 + $0xc]]
        %s435 = sld [smem:[#allocation3 + $0xd]]
        %s436 = sld [smem:[#allocation3 + $0xe]]
        %s437 = sld [smem:[#allocation3 + $0xf]]
        %s438 = sld [smem:[#allocation3 + $0x10]]
        %s439 = sld [smem:[#allocation3 + $0x11]]
        %s440 = sld [smem:[#allocation3 + $0x12]]
        %s441 = sld [smem:[#allocation3 + $0x13]]
        %s442 = sld [smem:[#allocation3 + $0x14]]
        %s443 = sld [smem:[#allocation3 + $0x15]]
        %s444 = sld [smem:[#allocation3 + $0x16]]
        %s445 = sld [smem:[#allocation3 + $0x17]]
        %s446 = sld [smem:[#allocation3 + $0x18]]
        %s447 = sld [smem:[#allocation3 + $0x19]]
        %s448 = sld [smem:[#allocation3 + $0x1a]]
        %s449 = sld [smem:[#allocation3 + $0x1b]]
        %s450 = sld [smem:[#allocation3 + $0x1c]]
        %s451 = sld [smem:[#allocation3 + $0x1d]]
        %s452 = sld [smem:[#allocation3 + $0x1e]]
        %s453 = sld [smem:[#allocation3 + $0x1f]]
        %s454 = sld [smem:[#allocation3 + $0x20]]
        %s455 = sld [smem:[#allocation3 + $0x21]]
        %s456 = sld [smem:[#allocation3 + $0x22]]
        %s457 = sld [smem:[#allocation3 + $0x23]]
        %s458 = sld [smem:[#allocation4]]
        %s459 = sld [smem:[#allocation4 + $0x1]]
        %s460 = sld [smem:[#allocation4 + $0x2]]
        %s461 = sld [smem:[#allocation4 + $0x3]]
        %s462 = sld [smem:[#allocation4 + $0x4]]
        %s463 = sld [smem:[#allocation4 + $0x5]]
        %s464 = sld [smem:[#allocation4 + $0x6]]
        %s465 = sld [smem:[#allocation4 + $0x7]]
        %s466 = sld [smem:[#allocation4 + $0x8]]
        %s467 = sld [smem:[#allocation4 + $0x9]]
        %s468 = sld [smem:[#allocation4 + $0xa]]
        %s469 = sld [smem:[#allocation4 + $0xb]]
        %s470 = sld [smem:[#allocation4 + $0xc]]
        %s471 = sld [smem:[#allocation4 + $0xd]]
        %s472 = sld [smem:[#allocation4 + $0xe]]
        %s473 = sld [smem:[#allocation4 + $0xf]]
        %s474 = sld [smem:[#allocation4 + $0x10]]
        %s475 = sld [smem:[#allocation4 + $0x11]]
        %s476 = sld [smem:[#allocation5]]
        %s477 = sld [smem:[#allocation5 + $0x1]]
        %s478 = sld [smem:[#allocation5 + $0x2]]
        %s479 = sld [smem:[#allocation5 + $0x3]]
        %s480 = sld [smem:[#allocation5 + $0x4]]
        %s481 = sld [smem:[#allocation5 + $0x5]]
        %s482 = sld [smem:[#allocation6]]
        %s483 = sld [smem:[#allocation6 + $0x1]]
        %s484 = sld [smem:[#allocation6 + $0x2]]
        loop: start=0, step=1, limit=4
        $region63: #{_forward_rows.1} parent=57 // loop_pre_header
          _
        $region64: #{_forward_rows.1} parent=57 // loop_header
          %s486 = sphi 0, %s490
          %p487 = scmp.ge.s32.totalorder %s486, 4
        $region65: #{_forward_rows.1} parent=57 // loop_header_branch
          %489 = sbr.rel (%p487) target = $region69
        $region66: #{_forward_rows.1} parent=57 // loop_body
          %s491 = smul.u32 %s486, 64
          %s492 = scalar_lea.vmem %s404, %s491 [#allocation7]
          %v493 = vld [vmem:[%s492] sm:$0xff]
          %v494 = vld [vmem:[%s492 + $0x8] sm:$0xff]
          %v495 = vld [vmem:[%s492 + $0x10] sm:$0xff]
          %v496 = vld [vmem:[%s492 + $0x18] sm:$0xff]
          %v497 = vld [vmem:[%s492 + $0x20] sm:$0xff]
          %v498 = vld [vmem:[%s492 + $0x28] sm:$0xff]
          %v499 = vld [vmem:[%s492 + $0x30] sm:$0xff]
          %v500 = vld [vmem:[%s492 + $0x38] sm:$0xff]
          %s501 = sadd.s32 %s491, 256
          %s502 = scalar_lea.vmem %s404, %s501 [#allocation7]
          %v503 = vld [vmem:[%s502] sm:$0xff]
          %v504 = vld [vmem:[%s502 + $0x8] sm:$0xff]
          %v505 = vld [vmem:[%s502 + $0x10] sm:$0xff]
          %v506 = vld [vmem:[%s502 + $0x18] sm:$0xff]
          %v507 = vld [vmem:[%s502 + $0x20] sm:$0xff]
          %v508 = vld [vmem:[%s502 + $0x28] sm:$0xff]
          %v509 = vld [vmem:[%s502 + $0x30] sm:$0xff]
          %v510 = vld [vmem:[%s502 + $0x38] sm:$0xff]
          %v511 = vstv %s422
          %v512 = vmul.f32 %v493, %v511
          %v513 = vmul.f32 %v494, %v511
          %v514 = vmul.f32 %v495, %v511
          %v515 = vmul.f32 %v496, %v511
          %v516 = vmul.f32 %v497, %v511
          %v517 = vmul.f32 %v498, %v511
          %v518 = vmul.f32 %v499, %v511
          %v519 = vmul.f32 %v500, %v511
          %v520 = vstv %s424
          %v521 = vmul.f32 %v503, %v520
          %v522 = vmul.f32 %v504, %v520
          %v523 = vmul.f32 %v505, %v520
          %v524 = vmul.f32 %v506, %v520
          %v525 = vmul.f32 %v507, %v520
          %v526 = vmul.f32 %v508, %v520
          %v527 = vmul.f32 %v509, %v520
          %v528 = vmul.f32 %v510, %v520
          %v529 = vadd.f32 %v512, %v521
          %v530 = vadd.f32 %v513, %v522
          %v531 = vadd.f32 %v514, %v523
          %v532 = vadd.f32 %v515, %v524
          %v533 = vadd.f32 %v516, %v525
          %v534 = vadd.f32 %v517, %v526
          %v535 = vadd.f32 %v518, %v527
          %v536 = vadd.f32 %v519, %v528
          %v537 = vstv %s458
          %v538 = vadd.f32 %v529, %v537
          %v539 = vadd.f32 %v530, %v537
          %v540 = vadd.f32 %v531, %v537
          %v541 = vadd.f32 %v532, %v537
          %v542 = vadd.f32 %v533, %v537
          %v543 = vadd.f32 %v534, %v537
          %v544 = vadd.f32 %v535, %v537
          %v545 = vadd.f32 %v536, %v537
          %v546 = vtanh.pop %v538
          %v547 = vtanh.pop %v539
          %v548 = vtanh.pop %v540
          %v549 = vtanh.pop %v541
          %v550 = vtanh.pop %v542
          %v551 = vtanh.pop %v543
          %v552 = vtanh.pop %v544
          %v553 = vtanh.pop %v545
          %v554 = vstv %s423
          %v555 = vmul.f32 %v493, %v554
          %v556 = vmul.f32 %v494, %v554
          %v557 = vmul.f32 %v495, %v554
          %v558 = vmul.f32 %v496, %v554
          %v559 = vmul.f32 %v497, %v554
          %v560 = vmul.f32 %v498, %v554
          %v561 = vmul.f32 %v499, %v554
          %v562 = vmul.f32 %v500, %v554
          %v563 = vstv %s425
          %v564 = vmul.f32 %v503, %v563
          %v565 = vmul.f32 %v504, %v563
          %v566 = vmul.f32 %v505, %v563
          %v567 = vmul.f32 %v506, %v563
          %v568 = vmul.f32 %v507, %v563
          %v569 = vmul.f32 %v508, %v563
          %v570 = vmul.f32 %v509, %v563
          %v571 = vmul.f32 %v510, %v563
          %v572 = vadd.f32 %v555, %v564
          %v573 = vadd.f32 %v556, %v565
          %v574 = vadd.f32 %v557, %v566
          %v575 = vadd.f32 %v558, %v567
          %v576 = vadd.f32 %v559, %v568
          %v577 = vadd.f32 %v560, %v569
          %v578 = vadd.f32 %v561, %v570
          %v579 = vadd.f32 %v562, %v571
          %v580 = vstv %s459
          %v581 = vadd.f32 %v572, %v580
          %v582 = vadd.f32 %v573, %v580
          %v583 = vadd.f32 %v574, %v580
          %v584 = vadd.f32 %v575, %v580
          %v585 = vadd.f32 %v576, %v580
          %v586 = vadd.f32 %v577, %v580
          %v587 = vadd.f32 %v578, %v580
          %v588 = vadd.f32 %v579, %v580
          %v589 = vtanh.pop %v581
          %v590 = vtanh.pop %v582
          %v591 = vtanh.pop %v583
          %v592 = vtanh.pop %v584
          %v593 = vtanh.pop %v585
          %v594 = vtanh.pop %v586
          %v595 = vtanh.pop %v587
          %v596 = vtanh.pop %v588
          %v597 = vstv %s426
          %v598 = vmul.f32 %v546, %v597
          %v599 = vmul.f32 %v547, %v597
          %v600 = vmul.f32 %v548, %v597
          %v601 = vmul.f32 %v549, %v597
          %v602 = vmul.f32 %v550, %v597
          %v603 = vmul.f32 %v551, %v597
          %v604 = vmul.f32 %v552, %v597
          %v605 = vmul.f32 %v553, %v597
          %v606 = vstv %s428
          %v607 = vmul.f32 %v589, %v606
          %v608 = vmul.f32 %v590, %v606
          %v609 = vmul.f32 %v591, %v606
          %v610 = vmul.f32 %v592, %v606
          %v611 = vmul.f32 %v593, %v606
          %v612 = vmul.f32 %v594, %v606
          %v613 = vmul.f32 %v595, %v606
          %v614 = vmul.f32 %v596, %v606
          %v615 = vadd.f32 %v598, %v607
          %v616 = vadd.f32 %v599, %v608
          %v617 = vadd.f32 %v600, %v609
          %v618 = vadd.f32 %v601, %v610
          %v619 = vadd.f32 %v602, %v611
          %v620 = vadd.f32 %v603, %v612
          %v621 = vadd.f32 %v604, %v613
          %v622 = vadd.f32 %v605, %v614
          %v623 = vstv %s460
          %v624 = vadd.f32 %v615, %v623
          %v625 = vadd.f32 %v616, %v623
          %v626 = vadd.f32 %v617, %v623
          %v627 = vadd.f32 %v618, %v623
          %v628 = vadd.f32 %v619, %v623
          %v629 = vadd.f32 %v620, %v623
          %v630 = vadd.f32 %v621, %v623
          %v631 = vadd.f32 %v622, %v623
          %v632 = vtanh.pop %v624
          %v633 = vtanh.pop %v625
          %v634 = vtanh.pop %v626
          %v635 = vtanh.pop %v627
          %v636 = vtanh.pop %v628
          %v637 = vtanh.pop %v629
          %v638 = vtanh.pop %v630
          %v639 = vtanh.pop %v631
          %v640 = vstv %s427
          %v641 = vmul.f32 %v546, %v640
          %v642 = vmul.f32 %v547, %v640
          %v643 = vmul.f32 %v548, %v640
          %v644 = vmul.f32 %v549, %v640
          %v645 = vmul.f32 %v550, %v640
          %v646 = vmul.f32 %v551, %v640
          %v647 = vmul.f32 %v552, %v640
          %v648 = vmul.f32 %v553, %v640
          %v649 = vstv %s429
          %v650 = vmul.f32 %v589, %v649
          %v651 = vmul.f32 %v590, %v649
          %v652 = vmul.f32 %v591, %v649
          %v653 = vmul.f32 %v592, %v649
          %v654 = vmul.f32 %v593, %v649
          %v655 = vmul.f32 %v594, %v649
          %v656 = vmul.f32 %v595, %v649
          %v657 = vmul.f32 %v596, %v649
          %v658 = vadd.f32 %v641, %v650
          %v659 = vadd.f32 %v642, %v651
          %v660 = vadd.f32 %v643, %v652
          %v661 = vadd.f32 %v644, %v653
          %v662 = vadd.f32 %v645, %v654
          %v663 = vadd.f32 %v646, %v655
          %v664 = vadd.f32 %v647, %v656
          %v665 = vadd.f32 %v648, %v657
          %v666 = vstv %s461
          %v667 = vadd.f32 %v658, %v666
          %v668 = vadd.f32 %v659, %v666
          %v669 = vadd.f32 %v660, %v666
          %v670 = vadd.f32 %v661, %v666
          %v671 = vadd.f32 %v662, %v666
          %v672 = vadd.f32 %v663, %v666
          %v673 = vadd.f32 %v664, %v666
          %v674 = vadd.f32 %v665, %v666
          %v675 = vtanh.pop %v667
          %v676 = vtanh.pop %v668
          %v677 = vtanh.pop %v669
          %v678 = vtanh.pop %v670
          %v679 = vtanh.pop %v671
          %v680 = vtanh.pop %v672
          %v681 = vtanh.pop %v673
          %v682 = vtanh.pop %v674
          %v683 = vstv %s430
          %v684 = vmul.f32 %v632, %v683
          %v685 = vmul.f32 %v633, %v683
          %v686 = vmul.f32 %v634, %v683
          %v687 = vmul.f32 %v635, %v683
          %v688 = vmul.f32 %v636, %v683
          %v689 = vmul.f32 %v637, %v683
          %v690 = vmul.f32 %v638, %v683
          %v691 = vmul.f32 %v639, %v683
          %v692 = vstv %s432
          %v693 = vmul.f32 %v675, %v692
          %v694 = vmul.f32 %v676, %v692
          %v695 = vmul.f32 %v677, %v692
          %v696 = vmul.f32 %v678, %v692
          %v697 = vmul.f32 %v679, %v692
          %v698 = vmul.f32 %v680, %v692
          %v699 = vmul.f32 %v681, %v692
          %v700 = vmul.f32 %v682, %v692
          %v701 = vadd.f32 %v684, %v693
          %v702 = vadd.f32 %v685, %v694
          %v703 = vadd.f32 %v686, %v695
          %v704 = vadd.f32 %v687, %v696
          %v705 = vadd.f32 %v688, %v697
          %v706 = vadd.f32 %v689, %v698
          %v707 = vadd.f32 %v690, %v699
          %v708 = vadd.f32 %v691, %v700
          %v709 = vstv %s462
          %v710 = vadd.f32 %v701, %v709
          %v711 = vadd.f32 %v702, %v709
          %v712 = vadd.f32 %v703, %v709
          %v713 = vadd.f32 %v704, %v709
          %v714 = vadd.f32 %v705, %v709
          %v715 = vadd.f32 %v706, %v709
          %v716 = vadd.f32 %v707, %v709
          %v717 = vadd.f32 %v708, %v709
          %v718 = vtanh.pop %v710
          %v719 = vtanh.pop %v711
          %v720 = vtanh.pop %v712
          %v721 = vtanh.pop %v713
          %v722 = vtanh.pop %v714
          %v723 = vtanh.pop %v715
          %v724 = vtanh.pop %v716
          %v725 = vtanh.pop %v717
          %v726 = vstv %s431
          %v727 = vmul.f32 %v632, %v726
          %v728 = vmul.f32 %v633, %v726
          %v729 = vmul.f32 %v634, %v726
          %v730 = vmul.f32 %v635, %v726
          %v731 = vmul.f32 %v636, %v726
          %v732 = vmul.f32 %v637, %v726
          %v733 = vmul.f32 %v638, %v726
          %v734 = vmul.f32 %v639, %v726
          %v735 = vstv %s433
          %v736 = vmul.f32 %v675, %v735
          %v737 = vmul.f32 %v676, %v735
          %v738 = vmul.f32 %v677, %v735
          %v739 = vmul.f32 %v678, %v735
          %v740 = vmul.f32 %v679, %v735
          %v741 = vmul.f32 %v680, %v735
          %v742 = vmul.f32 %v681, %v735
          %v743 = vmul.f32 %v682, %v735
          %v744 = vadd.f32 %v727, %v736
          %v745 = vadd.f32 %v728, %v737
          %v746 = vadd.f32 %v729, %v738
          %v747 = vadd.f32 %v730, %v739
          %v748 = vadd.f32 %v731, %v740
          %v749 = vadd.f32 %v732, %v741
          %v750 = vadd.f32 %v733, %v742
          %v751 = vadd.f32 %v734, %v743
          %v752 = vstv %s463
          %v753 = vadd.f32 %v744, %v752
          %v754 = vadd.f32 %v745, %v752
          %v755 = vadd.f32 %v746, %v752
          %v756 = vadd.f32 %v747, %v752
          %v757 = vadd.f32 %v748, %v752
          %v758 = vadd.f32 %v749, %v752
          %v759 = vadd.f32 %v750, %v752
          %v760 = vadd.f32 %v751, %v752
          %v761 = vtanh.pop %v753
          %v762 = vtanh.pop %v754
          %v763 = vtanh.pop %v755
          %v764 = vtanh.pop %v756
          %v765 = vtanh.pop %v757
          %v766 = vtanh.pop %v758
          %v767 = vtanh.pop %v759
          %v768 = vtanh.pop %v760
          %v769 = vstv %s434
          %v770 = vmul.f32 %v718, %v769
          %v771 = vmul.f32 %v719, %v769
          %v772 = vmul.f32 %v720, %v769
          %v773 = vmul.f32 %v721, %v769
          %v774 = vmul.f32 %v722, %v769
          %v775 = vmul.f32 %v723, %v769
          %v776 = vmul.f32 %v724, %v769
          %v777 = vmul.f32 %v725, %v769
          %v778 = vstv %s436
          %v779 = vmul.f32 %v761, %v778
          %v780 = vmul.f32 %v762, %v778
          %v781 = vmul.f32 %v763, %v778
          %v782 = vmul.f32 %v764, %v778
          %v783 = vmul.f32 %v765, %v778
          %v784 = vmul.f32 %v766, %v778
          %v785 = vmul.f32 %v767, %v778
          %v786 = vmul.f32 %v768, %v778
          %v787 = vadd.f32 %v770, %v779
          %v788 = vadd.f32 %v771, %v780
          %v789 = vadd.f32 %v772, %v781
          %v790 = vadd.f32 %v773, %v782
          %v791 = vadd.f32 %v774, %v783
          %v792 = vadd.f32 %v775, %v784
          %v793 = vadd.f32 %v776, %v785
          %v794 = vadd.f32 %v777, %v786
          %v795 = vstv %s464
          %v796 = vadd.f32 %v787, %v795
          %v797 = vadd.f32 %v788, %v795
          %v798 = vadd.f32 %v789, %v795
          %v799 = vadd.f32 %v790, %v795
          %v800 = vadd.f32 %v791, %v795
          %v801 = vadd.f32 %v792, %v795
          %v802 = vadd.f32 %v793, %v795
          %v803 = vadd.f32 %v794, %v795
          %v804 = vtanh.pop %v796
          %v805 = vtanh.pop %v797
          %v806 = vtanh.pop %v798
          %v807 = vtanh.pop %v799
          %v808 = vtanh.pop %v800
          %v809 = vtanh.pop %v801
          %v810 = vtanh.pop %v802
          %v811 = vtanh.pop %v803
          %v812 = vstv %s435
          %v813 = vmul.f32 %v718, %v812
          %v814 = vmul.f32 %v719, %v812
          %v815 = vmul.f32 %v720, %v812
          %v816 = vmul.f32 %v721, %v812
          %v817 = vmul.f32 %v722, %v812
          %v818 = vmul.f32 %v723, %v812
          %v819 = vmul.f32 %v724, %v812
          %v820 = vmul.f32 %v725, %v812
          %v821 = vstv %s437
          %v822 = vmul.f32 %v761, %v821
          %v823 = vmul.f32 %v762, %v821
          %v824 = vmul.f32 %v763, %v821
          %v825 = vmul.f32 %v764, %v821
          %v826 = vmul.f32 %v765, %v821
          %v827 = vmul.f32 %v766, %v821
          %v828 = vmul.f32 %v767, %v821
          %v829 = vmul.f32 %v768, %v821
          %v830 = vadd.f32 %v813, %v822
          %v831 = vadd.f32 %v814, %v823
          %v832 = vadd.f32 %v815, %v824
          %v833 = vadd.f32 %v816, %v825
          %v834 = vadd.f32 %v817, %v826
          %v835 = vadd.f32 %v818, %v827
          %v836 = vadd.f32 %v819, %v828
          %v837 = vadd.f32 %v820, %v829
          %v838 = vstv %s465
          %v839 = vadd.f32 %v830, %v838
          %v840 = vadd.f32 %v831, %v838
          %v841 = vadd.f32 %v832, %v838
          %v842 = vadd.f32 %v833, %v838
          %v843 = vadd.f32 %v834, %v838
          %v844 = vadd.f32 %v835, %v838
          %v845 = vadd.f32 %v836, %v838
          %v846 = vadd.f32 %v837, %v838
          %v847 = vtanh.pop %v839
          %v848 = vtanh.pop %v840
          %v849 = vtanh.pop %v841
          %v850 = vtanh.pop %v842
          %v851 = vtanh.pop %v843
          %v852 = vtanh.pop %v844
          %v853 = vtanh.pop %v845
          %v854 = vtanh.pop %v846
          %v855 = vstv %s438
          %v856 = vmul.f32 %v804, %v855
          %v857 = vmul.f32 %v805, %v855
          %v858 = vmul.f32 %v806, %v855
          %v859 = vmul.f32 %v807, %v855
          %v860 = vmul.f32 %v808, %v855
          %v861 = vmul.f32 %v809, %v855
          %v862 = vmul.f32 %v810, %v855
          %v863 = vmul.f32 %v811, %v855
          %v864 = vstv %s440
          %v865 = vmul.f32 %v847, %v864
          %v866 = vmul.f32 %v848, %v864
          %v867 = vmul.f32 %v849, %v864
          %v868 = vmul.f32 %v850, %v864
          %v869 = vmul.f32 %v851, %v864
          %v870 = vmul.f32 %v852, %v864
          %v871 = vmul.f32 %v853, %v864
          %v872 = vmul.f32 %v854, %v864
          %v873 = vadd.f32 %v856, %v865
          %v874 = vadd.f32 %v857, %v866
          %v875 = vadd.f32 %v858, %v867
          %v876 = vadd.f32 %v859, %v868
          %v877 = vadd.f32 %v860, %v869
          %v878 = vadd.f32 %v861, %v870
          %v879 = vadd.f32 %v862, %v871
          %v880 = vadd.f32 %v863, %v872
          %v881 = vstv %s466
          %v882 = vadd.f32 %v873, %v881
          %v883 = vadd.f32 %v874, %v881
          %v884 = vadd.f32 %v875, %v881
          %v885 = vadd.f32 %v876, %v881
          %v886 = vadd.f32 %v877, %v881
          %v887 = vadd.f32 %v878, %v881
          %v888 = vadd.f32 %v879, %v881
          %v889 = vadd.f32 %v880, %v881
          %v890 = vtanh.pop %v882
          %v891 = vtanh.pop %v883
          %v892 = vtanh.pop %v884
          %v893 = vtanh.pop %v885
          %v894 = vtanh.pop %v886
          %v895 = vtanh.pop %v887
          %v896 = vtanh.pop %v888
          %v897 = vtanh.pop %v889
          %v898 = vstv %s439
          %v899 = vmul.f32 %v804, %v898
          %v900 = vmul.f32 %v805, %v898
          %v901 = vmul.f32 %v806, %v898
          %v902 = vmul.f32 %v807, %v898
          %v903 = vmul.f32 %v808, %v898
          %v904 = vmul.f32 %v809, %v898
          %v905 = vmul.f32 %v810, %v898
          %v906 = vmul.f32 %v811, %v898
          %v907 = vstv %s441
          %v908 = vmul.f32 %v847, %v907
          %v909 = vmul.f32 %v848, %v907
          %v910 = vmul.f32 %v849, %v907
          %v911 = vmul.f32 %v850, %v907
          %v912 = vmul.f32 %v851, %v907
          %v913 = vmul.f32 %v852, %v907
          %v914 = vmul.f32 %v853, %v907
          %v915 = vmul.f32 %v854, %v907
          %v916 = vadd.f32 %v899, %v908
          %v917 = vadd.f32 %v900, %v909
          %v918 = vadd.f32 %v901, %v910
          %v919 = vadd.f32 %v902, %v911
          %v920 = vadd.f32 %v903, %v912
          %v921 = vadd.f32 %v904, %v913
          %v922 = vadd.f32 %v905, %v914
          %v923 = vadd.f32 %v906, %v915
          %v924 = vstv %s467
          %v925 = vadd.f32 %v916, %v924
          %v926 = vadd.f32 %v917, %v924
          %v927 = vadd.f32 %v918, %v924
          %v928 = vadd.f32 %v919, %v924
          %v929 = vadd.f32 %v920, %v924
          %v930 = vadd.f32 %v921, %v924
          %v931 = vadd.f32 %v922, %v924
          %v932 = vadd.f32 %v923, %v924
          %v933 = vtanh.pop %v925
          %v934 = vtanh.pop %v926
          %v935 = vtanh.pop %v927
          %v936 = vtanh.pop %v928
          %v937 = vtanh.pop %v929
          %v938 = vtanh.pop %v930
          %v939 = vtanh.pop %v931
          %v940 = vtanh.pop %v932
          %v941 = vstv %s442
          %v942 = vmul.f32 %v890, %v941
          %v943 = vmul.f32 %v891, %v941
          %v944 = vmul.f32 %v892, %v941
          %v945 = vmul.f32 %v893, %v941
          %v946 = vmul.f32 %v894, %v941
          %v947 = vmul.f32 %v895, %v941
          %v948 = vmul.f32 %v896, %v941
          %v949 = vmul.f32 %v897, %v941
          %v950 = vstv %s444
          %v951 = vmul.f32 %v933, %v950
          %v952 = vmul.f32 %v934, %v950
          %v953 = vmul.f32 %v935, %v950
          %v954 = vmul.f32 %v936, %v950
          %v955 = vmul.f32 %v937, %v950
          %v956 = vmul.f32 %v938, %v950
          %v957 = vmul.f32 %v939, %v950
          %v958 = vmul.f32 %v940, %v950
          %v959 = vadd.f32 %v942, %v951
          %v960 = vadd.f32 %v943, %v952
          %v961 = vadd.f32 %v944, %v953
          %v962 = vadd.f32 %v945, %v954
          %v963 = vadd.f32 %v946, %v955
          %v964 = vadd.f32 %v947, %v956
          %v965 = vadd.f32 %v948, %v957
          %v966 = vadd.f32 %v949, %v958
          %v967 = vstv %s468
          %v968 = vadd.f32 %v959, %v967
          %v969 = vadd.f32 %v960, %v967
          %v970 = vadd.f32 %v961, %v967
          %v971 = vadd.f32 %v962, %v967
          %v972 = vadd.f32 %v963, %v967
          %v973 = vadd.f32 %v964, %v967
          %v974 = vadd.f32 %v965, %v967
          %v975 = vadd.f32 %v966, %v967
          %v976 = vtanh.pop %v968
          %v977 = vtanh.pop %v969
          %v978 = vtanh.pop %v970
          %v979 = vtanh.pop %v971
          %v980 = vtanh.pop %v972
          %v981 = vtanh.pop %v973
          %v982 = vtanh.pop %v974
          %v983 = vtanh.pop %v975
          %v984 = vstv %s443
          %v985 = vmul.f32 %v890, %v984
          %v986 = vmul.f32 %v891, %v984
          %v987 = vmul.f32 %v892, %v984
          %v988 = vmul.f32 %v893, %v984
          %v989 = vmul.f32 %v894, %v984
          %v990 = vmul.f32 %v895, %v984
          %v991 = vmul.f32 %v896, %v984
          %v992 = vmul.f32 %v897, %v984
          %v993 = vstv %s445
          %v994 = vmul.f32 %v933, %v993
          %v995 = vmul.f32 %v934, %v993
          %v996 = vmul.f32 %v935, %v993
          %v997 = vmul.f32 %v936, %v993
          %v998 = vmul.f32 %v937, %v993
          %v999 = vmul.f32 %v938, %v993
          %v1000 = vmul.f32 %v939, %v993
          %v1001 = vmul.f32 %v940, %v993
          %v1002 = vadd.f32 %v985, %v994
          %v1003 = vadd.f32 %v986, %v995
          %v1004 = vadd.f32 %v987, %v996
          %v1005 = vadd.f32 %v988, %v997
          %v1006 = vadd.f32 %v989, %v998
          %v1007 = vadd.f32 %v990, %v999
          %v1008 = vadd.f32 %v991, %v1000
          %v1009 = vadd.f32 %v992, %v1001
          %v1010 = vstv %s469
          %v1011 = vadd.f32 %v1002, %v1010
          %v1012 = vadd.f32 %v1003, %v1010
          %v1013 = vadd.f32 %v1004, %v1010
          %v1014 = vadd.f32 %v1005, %v1010
          %v1015 = vadd.f32 %v1006, %v1010
          %v1016 = vadd.f32 %v1007, %v1010
          %v1017 = vadd.f32 %v1008, %v1010
          %v1018 = vadd.f32 %v1009, %v1010
          %v1019 = vtanh.pop %v1011
          %v1020 = vtanh.pop %v1012
          %v1021 = vtanh.pop %v1013
          %v1022 = vtanh.pop %v1014
          %v1023 = vtanh.pop %v1015
          %v1024 = vtanh.pop %v1016
          %v1025 = vtanh.pop %v1017
          %v1026 = vtanh.pop %v1018
          %v1027 = vstv %s446
          %v1028 = vmul.f32 %v976, %v1027
          %v1029 = vmul.f32 %v977, %v1027
          %v1030 = vmul.f32 %v978, %v1027
          %v1031 = vmul.f32 %v979, %v1027
          %v1032 = vmul.f32 %v980, %v1027
          %v1033 = vmul.f32 %v981, %v1027
          %v1034 = vmul.f32 %v982, %v1027
          %v1035 = vmul.f32 %v983, %v1027
          %v1036 = vstv %s448
          %v1037 = vmul.f32 %v1019, %v1036
          %v1038 = vmul.f32 %v1020, %v1036
          %v1039 = vmul.f32 %v1021, %v1036
          %v1040 = vmul.f32 %v1022, %v1036
          %v1041 = vmul.f32 %v1023, %v1036
          %v1042 = vmul.f32 %v1024, %v1036
          %v1043 = vmul.f32 %v1025, %v1036
          %v1044 = vmul.f32 %v1026, %v1036
          %v1045 = vadd.f32 %v1028, %v1037
          %v1046 = vadd.f32 %v1029, %v1038
          %v1047 = vadd.f32 %v1030, %v1039
          %v1048 = vadd.f32 %v1031, %v1040
          %v1049 = vadd.f32 %v1032, %v1041
          %v1050 = vadd.f32 %v1033, %v1042
          %v1051 = vadd.f32 %v1034, %v1043
          %v1052 = vadd.f32 %v1035, %v1044
          %v1053 = vstv %s470
          %v1054 = vadd.f32 %v1045, %v1053
          %v1055 = vadd.f32 %v1046, %v1053
          %v1056 = vadd.f32 %v1047, %v1053
          %v1057 = vadd.f32 %v1048, %v1053
          %v1058 = vadd.f32 %v1049, %v1053
          %v1059 = vadd.f32 %v1050, %v1053
          %v1060 = vadd.f32 %v1051, %v1053
          %v1061 = vadd.f32 %v1052, %v1053
          %v1062 = vtanh.pop %v1054
          %v1063 = vtanh.pop %v1055
          %v1064 = vtanh.pop %v1056
          %v1065 = vtanh.pop %v1057
          %v1066 = vtanh.pop %v1058
          %v1067 = vtanh.pop %v1059
          %v1068 = vtanh.pop %v1060
          %v1069 = vtanh.pop %v1061
          %v1070 = vstv %s447
          %v1071 = vmul.f32 %v976, %v1070
          %v1072 = vmul.f32 %v977, %v1070
          %v1073 = vmul.f32 %v978, %v1070
          %v1074 = vmul.f32 %v979, %v1070
          %v1075 = vmul.f32 %v980, %v1070
          %v1076 = vmul.f32 %v981, %v1070
          %v1077 = vmul.f32 %v982, %v1070
          %v1078 = vmul.f32 %v983, %v1070
          %v1079 = vstv %s449
          %v1080 = vmul.f32 %v1019, %v1079
          %v1081 = vmul.f32 %v1020, %v1079
          %v1082 = vmul.f32 %v1021, %v1079
          %v1083 = vmul.f32 %v1022, %v1079
          %v1084 = vmul.f32 %v1023, %v1079
          %v1085 = vmul.f32 %v1024, %v1079
          %v1086 = vmul.f32 %v1025, %v1079
          %v1087 = vmul.f32 %v1026, %v1079
          %v1088 = vadd.f32 %v1071, %v1080
          %v1089 = vadd.f32 %v1072, %v1081
          %v1090 = vadd.f32 %v1073, %v1082
          %v1091 = vadd.f32 %v1074, %v1083
          %v1092 = vadd.f32 %v1075, %v1084
          %v1093 = vadd.f32 %v1076, %v1085
          %v1094 = vadd.f32 %v1077, %v1086
          %v1095 = vadd.f32 %v1078, %v1087
          %v1096 = vstv %s471
          %v1097 = vadd.f32 %v1088, %v1096
          %v1098 = vadd.f32 %v1089, %v1096
          %v1099 = vadd.f32 %v1090, %v1096
          %v1100 = vadd.f32 %v1091, %v1096
          %v1101 = vadd.f32 %v1092, %v1096
          %v1102 = vadd.f32 %v1093, %v1096
          %v1103 = vadd.f32 %v1094, %v1096
          %v1104 = vadd.f32 %v1095, %v1096
          %v1105 = vtanh.pop %v1097
          %v1106 = vtanh.pop %v1098
          %v1107 = vtanh.pop %v1099
          %v1108 = vtanh.pop %v1100
          %v1109 = vtanh.pop %v1101
          %v1110 = vtanh.pop %v1102
          %v1111 = vtanh.pop %v1103
          %v1112 = vtanh.pop %v1104
          %v1113 = vstv %s450
          %v1114 = vmul.f32 %v1062, %v1113
          %v1115 = vmul.f32 %v1063, %v1113
          %v1116 = vmul.f32 %v1064, %v1113
          %v1117 = vmul.f32 %v1065, %v1113
          %v1118 = vmul.f32 %v1066, %v1113
          %v1119 = vmul.f32 %v1067, %v1113
          %v1120 = vmul.f32 %v1068, %v1113
          %v1121 = vmul.f32 %v1069, %v1113
          %v1122 = vstv %s452
          %v1123 = vmul.f32 %v1105, %v1122
          %v1124 = vmul.f32 %v1106, %v1122
          %v1125 = vmul.f32 %v1107, %v1122
          %v1126 = vmul.f32 %v1108, %v1122
          %v1127 = vmul.f32 %v1109, %v1122
          %v1128 = vmul.f32 %v1110, %v1122
          %v1129 = vmul.f32 %v1111, %v1122
          %v1130 = vmul.f32 %v1112, %v1122
          %v1131 = vadd.f32 %v1114, %v1123
          %v1132 = vadd.f32 %v1115, %v1124
          %v1133 = vadd.f32 %v1116, %v1125
          %v1134 = vadd.f32 %v1117, %v1126
          %v1135 = vadd.f32 %v1118, %v1127
          %v1136 = vadd.f32 %v1119, %v1128
          %v1137 = vadd.f32 %v1120, %v1129
          %v1138 = vadd.f32 %v1121, %v1130
          %v1139 = vstv %s472
          %v1140 = vadd.f32 %v1131, %v1139
          %v1141 = vadd.f32 %v1132, %v1139
          %v1142 = vadd.f32 %v1133, %v1139
          %v1143 = vadd.f32 %v1134, %v1139
          %v1144 = vadd.f32 %v1135, %v1139
          %v1145 = vadd.f32 %v1136, %v1139
          %v1146 = vadd.f32 %v1137, %v1139
          %v1147 = vadd.f32 %v1138, %v1139
          %v1148 = vtanh.pop %v1140
          %v1149 = vtanh.pop %v1141
          %v1150 = vtanh.pop %v1142
          %v1151 = vtanh.pop %v1143
          %v1152 = vtanh.pop %v1144
          %v1153 = vtanh.pop %v1145
          %v1154 = vtanh.pop %v1146
          %v1155 = vtanh.pop %v1147
          %v1156 = vstv %s451
          %v1157 = vmul.f32 %v1062, %v1156
          %v1158 = vmul.f32 %v1063, %v1156
          %v1159 = vmul.f32 %v1064, %v1156
          %v1160 = vmul.f32 %v1065, %v1156
          %v1161 = vmul.f32 %v1066, %v1156
          %v1162 = vmul.f32 %v1067, %v1156
          %v1163 = vmul.f32 %v1068, %v1156
          %v1164 = vmul.f32 %v1069, %v1156
          %v1165 = vstv %s453
          %v1166 = vmul.f32 %v1105, %v1165
          %v1167 = vmul.f32 %v1106, %v1165
          %v1168 = vmul.f32 %v1107, %v1165
          %v1169 = vmul.f32 %v1108, %v1165
          %v1170 = vmul.f32 %v1109, %v1165
          %v1171 = vmul.f32 %v1110, %v1165
          %v1172 = vmul.f32 %v1111, %v1165
          %v1173 = vmul.f32 %v1112, %v1165
          %v1174 = vadd.f32 %v1157, %v1166
          %v1175 = vadd.f32 %v1158, %v1167
          %v1176 = vadd.f32 %v1159, %v1168
          %v1177 = vadd.f32 %v1160, %v1169
          %v1178 = vadd.f32 %v1161, %v1170
          %v1179 = vadd.f32 %v1162, %v1171
          %v1180 = vadd.f32 %v1163, %v1172
          %v1181 = vadd.f32 %v1164, %v1173
          %v1182 = vstv %s473
          %v1183 = vadd.f32 %v1174, %v1182
          %v1184 = vadd.f32 %v1175, %v1182
          %v1185 = vadd.f32 %v1176, %v1182
          %v1186 = vadd.f32 %v1177, %v1182
          %v1187 = vadd.f32 %v1178, %v1182
          %v1188 = vadd.f32 %v1179, %v1182
          %v1189 = vadd.f32 %v1180, %v1182
          %v1190 = vadd.f32 %v1181, %v1182
          %v1191 = vtanh.pop %v1183
          %v1192 = vtanh.pop %v1184
          %v1193 = vtanh.pop %v1185
          %v1194 = vtanh.pop %v1186
          %v1195 = vtanh.pop %v1187
          %v1196 = vtanh.pop %v1188
          %v1197 = vtanh.pop %v1189
          %v1198 = vtanh.pop %v1190
          %v1199 = vstv %s454
          %v1200 = vmul.f32 %v1148, %v1199
          %v1201 = vmul.f32 %v1149, %v1199
          %v1202 = vmul.f32 %v1150, %v1199
          %v1203 = vmul.f32 %v1151, %v1199
          %v1204 = vmul.f32 %v1152, %v1199
          %v1205 = vmul.f32 %v1153, %v1199
          %v1206 = vmul.f32 %v1154, %v1199
          %v1207 = vmul.f32 %v1155, %v1199
          %v1208 = vstv %s456
          %v1209 = vmul.f32 %v1191, %v1208
          %v1210 = vmul.f32 %v1192, %v1208
          %v1211 = vmul.f32 %v1193, %v1208
          %v1212 = vmul.f32 %v1194, %v1208
          %v1213 = vmul.f32 %v1195, %v1208
          %v1214 = vmul.f32 %v1196, %v1208
          %v1215 = vmul.f32 %v1197, %v1208
          %v1216 = vmul.f32 %v1198, %v1208
          %v1217 = vadd.f32 %v1200, %v1209
          %v1218 = vadd.f32 %v1201, %v1210
          %v1219 = vadd.f32 %v1202, %v1211
          %v1220 = vadd.f32 %v1203, %v1212
          %v1221 = vadd.f32 %v1204, %v1213
          %v1222 = vadd.f32 %v1205, %v1214
          %v1223 = vadd.f32 %v1206, %v1215
          %v1224 = vadd.f32 %v1207, %v1216
          %v1225 = vstv %s474
          %v1226 = vadd.f32 %v1217, %v1225
          %v1227 = vadd.f32 %v1218, %v1225
          %v1228 = vadd.f32 %v1219, %v1225
          %v1229 = vadd.f32 %v1220, %v1225
          %v1230 = vadd.f32 %v1221, %v1225
          %v1231 = vadd.f32 %v1222, %v1225
          %v1232 = vadd.f32 %v1223, %v1225
          %v1233 = vadd.f32 %v1224, %v1225
          %v1234 = vtanh.pop %v1226
          %v1235 = vtanh.pop %v1227
          %v1236 = vtanh.pop %v1228
          %v1237 = vtanh.pop %v1229
          %v1238 = vtanh.pop %v1230
          %v1239 = vtanh.pop %v1231
          %v1240 = vtanh.pop %v1232
          %v1241 = vtanh.pop %v1233
          %v1242 = vstv %s455
          %v1243 = vmul.f32 %v1148, %v1242
          %v1244 = vmul.f32 %v1149, %v1242
          %v1245 = vmul.f32 %v1150, %v1242
          %v1246 = vmul.f32 %v1151, %v1242
          %v1247 = vmul.f32 %v1152, %v1242
          %v1248 = vmul.f32 %v1153, %v1242
          %v1249 = vmul.f32 %v1154, %v1242
          %v1250 = vmul.f32 %v1155, %v1242
          %v1251 = vstv %s457
          %v1252 = vmul.f32 %v1191, %v1251
          %v1253 = vmul.f32 %v1192, %v1251
          %v1254 = vmul.f32 %v1193, %v1251
          %v1255 = vmul.f32 %v1194, %v1251
          %v1256 = vmul.f32 %v1195, %v1251
          %v1257 = vmul.f32 %v1196, %v1251
          %v1258 = vmul.f32 %v1197, %v1251
          %v1259 = vmul.f32 %v1198, %v1251
          %v1260 = vadd.f32 %v1243, %v1252
          %v1261 = vadd.f32 %v1244, %v1253
          %v1262 = vadd.f32 %v1245, %v1254
          %v1263 = vadd.f32 %v1246, %v1255
          %v1264 = vadd.f32 %v1247, %v1256
          %v1265 = vadd.f32 %v1248, %v1257
          %v1266 = vadd.f32 %v1249, %v1258
          %v1267 = vadd.f32 %v1250, %v1259
          %v1268 = vstv %s475
          %v1269 = vadd.f32 %v1260, %v1268
          %v1270 = vadd.f32 %v1261, %v1268
          %v1271 = vadd.f32 %v1262, %v1268
          %v1272 = vadd.f32 %v1263, %v1268
          %v1273 = vadd.f32 %v1264, %v1268
          %v1274 = vadd.f32 %v1265, %v1268
          %v1275 = vadd.f32 %v1266, %v1268
          %v1276 = vadd.f32 %v1267, %v1268
          %v1277 = vtanh.pop %v1269
          %v1278 = vtanh.pop %v1270
          %v1279 = vtanh.pop %v1271
          %v1280 = vtanh.pop %v1272
          %v1281 = vtanh.pop %v1273
          %v1282 = vtanh.pop %v1274
          %v1283 = vtanh.pop %v1275
          %v1284 = vtanh.pop %v1276
          %v1285 = vstv %s476
          %v1286 = vmul.f32 %v1234, %v1285
          %v1287 = vmul.f32 %v1235, %v1285
          %v1288 = vmul.f32 %v1236, %v1285
          %v1289 = vmul.f32 %v1237, %v1285
          %v1290 = vmul.f32 %v1238, %v1285
          %v1291 = vmul.f32 %v1239, %v1285
          %v1292 = vmul.f32 %v1240, %v1285
          %v1293 = vmul.f32 %v1241, %v1285
          %v1294 = vstv %s479
          %v1295 = vmul.f32 %v1277, %v1294
          %v1296 = vmul.f32 %v1278, %v1294
          %v1297 = vmul.f32 %v1279, %v1294
          %v1298 = vmul.f32 %v1280, %v1294
          %v1299 = vmul.f32 %v1281, %v1294
          %v1300 = vmul.f32 %v1282, %v1294
          %v1301 = vmul.f32 %v1283, %v1294
          %v1302 = vmul.f32 %v1284, %v1294
          %v1303 = vadd.f32 %v1286, %v1295
          %v1304 = vadd.f32 %v1287, %v1296
          %v1305 = vadd.f32 %v1288, %v1297
          %v1306 = vadd.f32 %v1289, %v1298
          %v1307 = vadd.f32 %v1290, %v1299
          %v1308 = vadd.f32 %v1291, %v1300
          %v1309 = vadd.f32 %v1292, %v1301
          %v1310 = vadd.f32 %v1293, %v1302
          %v1311 = vstv %s482
          %v1312 = vadd.f32 %v1303, %v1311
          %v1313 = vadd.f32 %v1304, %v1311
          %v1314 = vadd.f32 %v1305, %v1311
          %v1315 = vadd.f32 %v1306, %v1311
          %v1316 = vadd.f32 %v1307, %v1311
          %v1317 = vadd.f32 %v1308, %v1311
          %v1318 = vadd.f32 %v1309, %v1311
          %v1319 = vadd.f32 %v1310, %v1311
          %v1320 = vmul.f32 %v1312, 0.5
          %v1321 = vmul.f32 %v1313, 0.5
          %v1322 = vmul.f32 %v1314, 0.5
          %v1323 = vmul.f32 %v1315, 0.5
          %v1324 = vmul.f32 %v1316, 0.5
          %v1325 = vmul.f32 %v1317, 0.5
          %v1326 = vmul.f32 %v1318, 0.5
          %v1327 = vmul.f32 %v1319, 0.5
          %v1328 = vtanh.pop %v1320
          %v1329 = vtanh.pop %v1321
          %v1330 = vtanh.pop %v1322
          %v1331 = vtanh.pop %v1323
          %v1332 = vtanh.pop %v1324
          %v1333 = vtanh.pop %v1325
          %v1334 = vtanh.pop %v1326
          %v1335 = vtanh.pop %v1327
          %v1336 = vmul.f32 %v1328, 0.5
          %v1337 = vmul.f32 %v1329, 0.5
          %v1338 = vmul.f32 %v1330, 0.5
          %v1339 = vmul.f32 %v1331, 0.5
          %v1340 = vmul.f32 %v1332, 0.5
          %v1341 = vmul.f32 %v1333, 0.5
          %v1342 = vmul.f32 %v1334, 0.5
          %v1343 = vmul.f32 %v1335, 0.5
          %v1344 = vadd.f32 %v1336, 0.5
          %v1345 = vadd.f32 %v1337, 0.5
          %v1346 = vadd.f32 %v1338, 0.5
          %v1347 = vadd.f32 %v1339, 0.5
          %v1348 = vadd.f32 %v1340, 0.5
          %v1349 = vadd.f32 %v1341, 0.5
          %v1350 = vadd.f32 %v1342, 0.5
          %v1351 = vadd.f32 %v1343, 0.5
          %s1352 = scalar_lea.vmem %s419, %s491 [#allocation8]
          %1353 = vst [vmem:[%s1352] sm:$0xff] %v1344
          %1354 = vst [vmem:[%s1352 + $0x8] sm:$0xff] %v1345
          %1355 = vst [vmem:[%s1352 + $0x10] sm:$0xff] %v1346
          %1356 = vst [vmem:[%s1352 + $0x18] sm:$0xff] %v1347
          %1357 = vst [vmem:[%s1352 + $0x20] sm:$0xff] %v1348
          %1358 = vst [vmem:[%s1352 + $0x28] sm:$0xff] %v1349
          %1359 = vst [vmem:[%s1352 + $0x30] sm:$0xff] %v1350
          %1360 = vst [vmem:[%s1352 + $0x38] sm:$0xff] %v1351
          %v1361 = vstv %s477
          %v1362 = vmul.f32 %v1234, %v1361
          %v1363 = vmul.f32 %v1235, %v1361
          %v1364 = vmul.f32 %v1236, %v1361
          %v1365 = vmul.f32 %v1237, %v1361
          %v1366 = vmul.f32 %v1238, %v1361
          %v1367 = vmul.f32 %v1239, %v1361
          %v1368 = vmul.f32 %v1240, %v1361
          %v1369 = vmul.f32 %v1241, %v1361
          %v1370 = vstv %s480
          %v1371 = vmul.f32 %v1277, %v1370
          %v1372 = vmul.f32 %v1278, %v1370
          %v1373 = vmul.f32 %v1279, %v1370
          %v1374 = vmul.f32 %v1280, %v1370
          %v1375 = vmul.f32 %v1281, %v1370
          %v1376 = vmul.f32 %v1282, %v1370
          %v1377 = vmul.f32 %v1283, %v1370
          %v1378 = vmul.f32 %v1284, %v1370
          %v1379 = vadd.f32 %v1362, %v1371
          %v1380 = vadd.f32 %v1363, %v1372
          %v1381 = vadd.f32 %v1364, %v1373
          %v1382 = vadd.f32 %v1365, %v1374
          %v1383 = vadd.f32 %v1366, %v1375
          %v1384 = vadd.f32 %v1367, %v1376
          %v1385 = vadd.f32 %v1368, %v1377
          %v1386 = vadd.f32 %v1369, %v1378
          %v1387 = vstv %s483
          %v1388 = vadd.f32 %v1379, %v1387
          %v1389 = vadd.f32 %v1380, %v1387
          %v1390 = vadd.f32 %v1381, %v1387
          %v1391 = vadd.f32 %v1382, %v1387
          %v1392 = vadd.f32 %v1383, %v1387
          %v1393 = vadd.f32 %v1384, %v1387
          %v1394 = vadd.f32 %v1385, %v1387
          %v1395 = vadd.f32 %v1386, %v1387
          %v1396 = vmul.f32 %v1388, 0.5
          %v1397 = vmul.f32 %v1389, 0.5
          %v1398 = vmul.f32 %v1390, 0.5
          %v1399 = vmul.f32 %v1391, 0.5
          %v1400 = vmul.f32 %v1392, 0.5
          %v1401 = vmul.f32 %v1393, 0.5
          %v1402 = vmul.f32 %v1394, 0.5
          %v1403 = vmul.f32 %v1395, 0.5
          %v1404 = vtanh.pop %v1396
          %v1405 = vtanh.pop %v1397
          %v1406 = vtanh.pop %v1398
          %v1407 = vtanh.pop %v1399
          %v1408 = vtanh.pop %v1400
          %v1409 = vtanh.pop %v1401
          %v1410 = vtanh.pop %v1402
          %v1411 = vtanh.pop %v1403
          %v1412 = vmul.f32 %v1404, 0.5
          %v1413 = vmul.f32 %v1405, 0.5
          %v1414 = vmul.f32 %v1406, 0.5
          %v1415 = vmul.f32 %v1407, 0.5
          %v1416 = vmul.f32 %v1408, 0.5
          %v1417 = vmul.f32 %v1409, 0.5
          %v1418 = vmul.f32 %v1410, 0.5
          %v1419 = vmul.f32 %v1411, 0.5
          %v1420 = vadd.f32 %v1412, 0.5
          %v1421 = vadd.f32 %v1413, 0.5
          %v1422 = vadd.f32 %v1414, 0.5
          %v1423 = vadd.f32 %v1415, 0.5
          %v1424 = vadd.f32 %v1416, 0.5
          %v1425 = vadd.f32 %v1417, 0.5
          %v1426 = vadd.f32 %v1418, 0.5
          %v1427 = vadd.f32 %v1419, 0.5
          %s1428 = scalar_lea.vmem %s419, %s501 [#allocation8]
          %1429 = vst [vmem:[%s1428] sm:$0xff] %v1420
          %1430 = vst [vmem:[%s1428 + $0x8] sm:$0xff] %v1421
          %1431 = vst [vmem:[%s1428 + $0x10] sm:$0xff] %v1422
          %1432 = vst [vmem:[%s1428 + $0x18] sm:$0xff] %v1423
          %1433 = vst [vmem:[%s1428 + $0x20] sm:$0xff] %v1424
          %1434 = vst [vmem:[%s1428 + $0x28] sm:$0xff] %v1425
          %1435 = vst [vmem:[%s1428 + $0x30] sm:$0xff] %v1426
          %1436 = vst [vmem:[%s1428 + $0x38] sm:$0xff] %v1427
          %v1437 = vstv %s478
          %v1438 = vmul.f32 %v1234, %v1437
          %v1439 = vmul.f32 %v1235, %v1437
          %v1440 = vmul.f32 %v1236, %v1437
          %v1441 = vmul.f32 %v1237, %v1437
          %v1442 = vmul.f32 %v1238, %v1437
          %v1443 = vmul.f32 %v1239, %v1437
          %v1444 = vmul.f32 %v1240, %v1437
          %v1445 = vmul.f32 %v1241, %v1437
          %v1446 = vstv %s481
          %v1447 = vmul.f32 %v1277, %v1446
          %v1448 = vmul.f32 %v1278, %v1446
          %v1449 = vmul.f32 %v1279, %v1446
          %v1450 = vmul.f32 %v1280, %v1446
          %v1451 = vmul.f32 %v1281, %v1446
          %v1452 = vmul.f32 %v1282, %v1446
          %v1453 = vmul.f32 %v1283, %v1446
          %v1454 = vmul.f32 %v1284, %v1446
          %v1455 = vadd.f32 %v1438, %v1447
          %v1456 = vadd.f32 %v1439, %v1448
          %v1457 = vadd.f32 %v1440, %v1449
          %v1458 = vadd.f32 %v1441, %v1450
          %v1459 = vadd.f32 %v1442, %v1451
          %v1460 = vadd.f32 %v1443, %v1452
          %v1461 = vadd.f32 %v1444, %v1453
          %v1462 = vadd.f32 %v1445, %v1454
          %v1463 = vstv %s484
          %v1464 = vadd.f32 %v1455, %v1463
          %v1465 = vadd.f32 %v1456, %v1463
          %v1466 = vadd.f32 %v1457, %v1463
          %v1467 = vadd.f32 %v1458, %v1463
          %v1468 = vadd.f32 %v1459, %v1463
          %v1469 = vadd.f32 %v1460, %v1463
          %v1470 = vadd.f32 %v1461, %v1463
          %v1471 = vadd.f32 %v1462, %v1463
          %v1472 = vmul.f32 %v1464, 0.5
          %v1473 = vmul.f32 %v1465, 0.5
          %v1474 = vmul.f32 %v1466, 0.5
          %v1475 = vmul.f32 %v1467, 0.5
          %v1476 = vmul.f32 %v1468, 0.5
          %v1477 = vmul.f32 %v1469, 0.5
          %v1478 = vmul.f32 %v1470, 0.5
          %v1479 = vmul.f32 %v1471, 0.5
          %v1480 = vtanh.pop %v1472
          %v1481 = vtanh.pop %v1473
          %v1482 = vtanh.pop %v1474
          %v1483 = vtanh.pop %v1475
          %v1484 = vtanh.pop %v1476
          %v1485 = vtanh.pop %v1477
          %v1486 = vtanh.pop %v1478
          %v1487 = vtanh.pop %v1479
          %v1488 = vmul.f32 %v1480, 0.5
          %v1489 = vmul.f32 %v1481, 0.5
          %v1490 = vmul.f32 %v1482, 0.5
          %v1491 = vmul.f32 %v1483, 0.5
          %v1492 = vmul.f32 %v1484, 0.5
          %v1493 = vmul.f32 %v1485, 0.5
          %v1494 = vmul.f32 %v1486, 0.5
          %v1495 = vmul.f32 %v1487, 0.5
          %v1496 = vadd.f32 %v1488, 0.5
          %v1497 = vadd.f32 %v1489, 0.5
          %v1498 = vadd.f32 %v1490, 0.5
          %v1499 = vadd.f32 %v1491, 0.5
          %v1500 = vadd.f32 %v1492, 0.5
          %v1501 = vadd.f32 %v1493, 0.5
          %v1502 = vadd.f32 %v1494, 0.5
          %v1503 = vadd.f32 %v1495, 0.5
          %s1504 = sadd.s32 %s491, 512
          %s1505 = scalar_lea.vmem %s419, %s1504 [#allocation8]
          %1506 = vst [vmem:[%s1505] sm:$0xff] %v1496
          %1507 = vst [vmem:[%s1505 + $0x8] sm:$0xff] %v1497
          %1508 = vst [vmem:[%s1505 + $0x10] sm:$0xff] %v1498
          %1509 = vst [vmem:[%s1505 + $0x18] sm:$0xff] %v1499
          %1510 = vst [vmem:[%s1505 + $0x20] sm:$0xff] %v1500
          %1511 = vst [vmem:[%s1505 + $0x28] sm:$0xff] %v1501
          %1512 = vst [vmem:[%s1505 + $0x30] sm:$0xff] %v1502
          %1513 = vst [vmem:[%s1505 + $0x38] sm:$0xff] %v1503
        $region67: #{_forward_rows.1} parent=57 // loop_footer
          %s490 = sadd.s32 1, %s486
        $region68: #{_forward_rows.1} parent=57 // loop_footer_branch
          %485 = sbr.rel target = $region64
        $region69: #{_forward_rows.1} parent=57 // loop_exit
          _
        %s1514 = sand.u32 %s68, 1
        %s1515 = sand.u32 %s68, 1
        %s1516 = smul.addr %s1515, 768
        %s1517 = scalar_lea.vmem [#allocation8], %s1516
        // Predicated region
        $region70: #{_forward_rows.1} parent=57 // pred_check
          %p1518 = pneg %p78
        $region71: #{_forward_rows.1} parent=57 // pred_check_branch
          %1520 = sbr.rel (%p1518) target = $region73
        $region72: #{_forward_rows.1} parent=57 // pred_region
          %s1521 = smul.u32 32, %s34
          %s1522 = smul.addr %s1521, 8
          %s1523 = scalar_lea.vmem %s5, %s1522
          // Predicated region
          $region74: #{_forward_rows.1} parent=72 // pred_check
            _
          $region75: #{_forward_rows.1} parent=72 // pred_check_branch
            %1525 = sbr.rel (0) target = $region77
          $region76: #{_forward_rows.1} parent=72 // pred_region
            // Predicated region
            $region78: #{_forward_rows.1} parent=76 // pred_check
              _
            $region79: #{_forward_rows.1} parent=76 // pred_check_branch
              %1527 = sbr.rel (0) target = $region81
            $region80: #{_forward_rows.1} parent=76 // pred_region
              // Predicated region
              $region93: #{_forward_rows.1} parent=80 // pred_check
                _
              $region94: #{_forward_rows.1} parent=80 // pred_check_branch
                %1732 = sbr.rel (0) target = $region96
              $region95: #{_forward_rows.1} parent=80 // pred_region
                loop: start=0, step=1, limit=1
                $region97: #{_forward_rows.1} parent=95 // loop_pre_header
                  _
                $region98: #{_forward_rows.1} parent=95 // loop_header
                  %s1734 = sphi 0, %s1738
                  %p1735 = scmp.ge.s32.totalorder %s1734, 1
                  %s1739 = sphi %s1517, %s1517
                  %s1740 = sphi %s1523, %s1523
                $region99: #{_forward_rows.1} parent=95 // loop_header_branch
                  %1737 = sbr.rel (%p1735) target = $region103
                $region100: #{_forward_rows.1} parent=95 // loop_body
                  %v1741 = vld [vmem:[%s1739] sm:$0xff]
                  %1742 = vst [vmem:[%s1740] sm:$0xff] %v1741
                  %v1743 = vld [vmem:[%s1739 + $0x8] sm:$0xff]
                  %1744 = vst [vmem:[%s1740 + $0x8] sm:$0xff] %v1743
                  %v1745 = vld [vmem:[%s1739 + $0x10] sm:$0xff]
                  %1746 = vst [vmem:[%s1740 + $0x10] sm:$0xff] %v1745
                  %v1747 = vld [vmem:[%s1739 + $0x18] sm:$0xff]
                  %1748 = vst [vmem:[%s1740 + $0x18] sm:$0xff] %v1747
                  %v1749 = vld [vmem:[%s1739 + $0x20] sm:$0xff]
                  %1750 = vst [vmem:[%s1740 + $0x20] sm:$0xff] %v1749
                  %v1751 = vld [vmem:[%s1739 + $0x28] sm:$0xff]
                  %1752 = vst [vmem:[%s1740 + $0x28] sm:$0xff] %v1751
                  %v1753 = vld [vmem:[%s1739 + $0x30] sm:$0xff]
                  %1754 = vst [vmem:[%s1740 + $0x30] sm:$0xff] %v1753
                  %v1755 = vld [vmem:[%s1739 + $0x38] sm:$0xff]
                  %1756 = vst [vmem:[%s1740 + $0x38] sm:$0xff] %v1755
                  %v1757 = vld [vmem:[%s1739 + $0x40] sm:$0xff]
                  %1758 = vst [vmem:[%s1740 + $0x40] sm:$0xff] %v1757
                  %v1759 = vld [vmem:[%s1739 + $0x48] sm:$0xff]
                  %1760 = vst [vmem:[%s1740 + $0x48] sm:$0xff] %v1759
                  %v1761 = vld [vmem:[%s1739 + $0x50] sm:$0xff]
                  %1762 = vst [vmem:[%s1740 + $0x50] sm:$0xff] %v1761
                  %v1763 = vld [vmem:[%s1739 + $0x58] sm:$0xff]
                  %1764 = vst [vmem:[%s1740 + $0x58] sm:$0xff] %v1763
                  %v1765 = vld [vmem:[%s1739 + $0x60] sm:$0xff]
                  %1766 = vst [vmem:[%s1740 + $0x60] sm:$0xff] %v1765
                  %v1767 = vld [vmem:[%s1739 + $0x68] sm:$0xff]
                  %1768 = vst [vmem:[%s1740 + $0x68] sm:$0xff] %v1767
                  %v1769 = vld [vmem:[%s1739 + $0x70] sm:$0xff]
                  %1770 = vst [vmem:[%s1740 + $0x70] sm:$0xff] %v1769
                  %v1771 = vld [vmem:[%s1739 + $0x78] sm:$0xff]
                  %1772 = vst [vmem:[%s1740 + $0x78] sm:$0xff] %v1771
                  %v1773 = vld [vmem:[%s1739 + $0x80] sm:$0xff]
                  %1774 = vst [vmem:[%s1740 + $0x80] sm:$0xff] %v1773
                  %v1775 = vld [vmem:[%s1739 + $0x88] sm:$0xff]
                  %1776 = vst [vmem:[%s1740 + $0x88] sm:$0xff] %v1775
                  %v1777 = vld [vmem:[%s1739 + $0x90] sm:$0xff]
                  %1778 = vst [vmem:[%s1740 + $0x90] sm:$0xff] %v1777
                  %v1779 = vld [vmem:[%s1739 + $0x98] sm:$0xff]
                  %1780 = vst [vmem:[%s1740 + $0x98] sm:$0xff] %v1779
                  %v1781 = vld [vmem:[%s1739 + $0xa0] sm:$0xff]
                  %1782 = vst [vmem:[%s1740 + $0xa0] sm:$0xff] %v1781
                  %v1783 = vld [vmem:[%s1739 + $0xa8] sm:$0xff]
                  %1784 = vst [vmem:[%s1740 + $0xa8] sm:$0xff] %v1783
                  %v1785 = vld [vmem:[%s1739 + $0xb0] sm:$0xff]
                  %1786 = vst [vmem:[%s1740 + $0xb0] sm:$0xff] %v1785
                  %v1787 = vld [vmem:[%s1739 + $0xb8] sm:$0xff]
                  %1788 = vst [vmem:[%s1740 + $0xb8] sm:$0xff] %v1787
                  %v1789 = vld [vmem:[%s1739 + $0xc0] sm:$0xff]
                  %1790 = vst [vmem:[%s1740 + $0xc0] sm:$0xff] %v1789
                  %v1791 = vld [vmem:[%s1739 + $0xc8] sm:$0xff]
                  %1792 = vst [vmem:[%s1740 + $0xc8] sm:$0xff] %v1791
                  %v1793 = vld [vmem:[%s1739 + $0xd0] sm:$0xff]
                  %1794 = vst [vmem:[%s1740 + $0xd0] sm:$0xff] %v1793
                  %v1795 = vld [vmem:[%s1739 + $0xd8] sm:$0xff]
                  %1796 = vst [vmem:[%s1740 + $0xd8] sm:$0xff] %v1795
                  %v1797 = vld [vmem:[%s1739 + $0xe0] sm:$0xff]
                  %1798 = vst [vmem:[%s1740 + $0xe0] sm:$0xff] %v1797
                  %v1799 = vld [vmem:[%s1739 + $0xe8] sm:$0xff]
                  %1800 = vst [vmem:[%s1740 + $0xe8] sm:$0xff] %v1799
                  %v1801 = vld [vmem:[%s1739 + $0xf0] sm:$0xff]
                  %1802 = vst [vmem:[%s1740 + $0xf0] sm:$0xff] %v1801
                  %v1803 = vld [vmem:[%s1739 + $0xf8] sm:$0xff]
                  %1804 = vst [vmem:[%s1740 + $0xf8] sm:$0xff] %v1803
                  %v1805 = vld [vmem:[%s1739 + $0x100] sm:$0xff]
                  %1806 = vst [vmem:[%s1740 + $0x200] sm:$0xff] %v1805
                  %v1807 = vld [vmem:[%s1739 + $0x108] sm:$0xff]
                  %1808 = vst [vmem:[%s1740 + $0x208] sm:$0xff] %v1807
                  %v1809 = vld [vmem:[%s1739 + $0x110] sm:$0xff]
                  %1810 = vst [vmem:[%s1740 + $0x210] sm:$0xff] %v1809
                  %v1811 = vld [vmem:[%s1739 + $0x118] sm:$0xff]
                  %1812 = vst [vmem:[%s1740 + $0x218] sm:$0xff] %v1811
                  %v1813 = vld [vmem:[%s1739 + $0x120] sm:$0xff]
                  %1814 = vst [vmem:[%s1740 + $0x220] sm:$0xff] %v1813
                  %v1815 = vld [vmem:[%s1739 + $0x128] sm:$0xff]
                  %1816 = vst [vmem:[%s1740 + $0x228] sm:$0xff] %v1815
                  %v1817 = vld [vmem:[%s1739 + $0x130] sm:$0xff]
                  %1818 = vst [vmem:[%s1740 + $0x230] sm:$0xff] %v1817
                  %v1819 = vld [vmem:[%s1739 + $0x138] sm:$0xff]
                  %1820 = vst [vmem:[%s1740 + $0x238] sm:$0xff] %v1819
                  %v1821 = vld [vmem:[%s1739 + $0x140] sm:$0xff]
                  %1822 = vst [vmem:[%s1740 + $0x240] sm:$0xff] %v1821
                  %v1823 = vld [vmem:[%s1739 + $0x148] sm:$0xff]
                  %1824 = vst [vmem:[%s1740 + $0x248] sm:$0xff] %v1823
                  %v1825 = vld [vmem:[%s1739 + $0x150] sm:$0xff]
                  %1826 = vst [vmem:[%s1740 + $0x250] sm:$0xff] %v1825
                  %v1827 = vld [vmem:[%s1739 + $0x158] sm:$0xff]
                  %1828 = vst [vmem:[%s1740 + $0x258] sm:$0xff] %v1827
                  %v1829 = vld [vmem:[%s1739 + $0x160] sm:$0xff]
                  %1830 = vst [vmem:[%s1740 + $0x260] sm:$0xff] %v1829
                  %v1831 = vld [vmem:[%s1739 + $0x168] sm:$0xff]
                  %1832 = vst [vmem:[%s1740 + $0x268] sm:$0xff] %v1831
                  %v1833 = vld [vmem:[%s1739 + $0x170] sm:$0xff]
                  %1834 = vst [vmem:[%s1740 + $0x270] sm:$0xff] %v1833
                  %v1835 = vld [vmem:[%s1739 + $0x178] sm:$0xff]
                  %1836 = vst [vmem:[%s1740 + $0x278] sm:$0xff] %v1835
                  %v1837 = vld [vmem:[%s1739 + $0x180] sm:$0xff]
                  %1838 = vst [vmem:[%s1740 + $0x280] sm:$0xff] %v1837
                  %v1839 = vld [vmem:[%s1739 + $0x188] sm:$0xff]
                  %1840 = vst [vmem:[%s1740 + $0x288] sm:$0xff] %v1839
                  %v1841 = vld [vmem:[%s1739 + $0x190] sm:$0xff]
                  %1842 = vst [vmem:[%s1740 + $0x290] sm:$0xff] %v1841
                  %v1843 = vld [vmem:[%s1739 + $0x198] sm:$0xff]
                  %1844 = vst [vmem:[%s1740 + $0x298] sm:$0xff] %v1843
                  %v1845 = vld [vmem:[%s1739 + $0x1a0] sm:$0xff]
                  %1846 = vst [vmem:[%s1740 + $0x2a0] sm:$0xff] %v1845
                  %v1847 = vld [vmem:[%s1739 + $0x1a8] sm:$0xff]
                  %1848 = vst [vmem:[%s1740 + $0x2a8] sm:$0xff] %v1847
                  %v1849 = vld [vmem:[%s1739 + $0x1b0] sm:$0xff]
                  %1850 = vst [vmem:[%s1740 + $0x2b0] sm:$0xff] %v1849
                  %v1851 = vld [vmem:[%s1739 + $0x1b8] sm:$0xff]
                  %1852 = vst [vmem:[%s1740 + $0x2b8] sm:$0xff] %v1851
                  %v1853 = vld [vmem:[%s1739 + $0x1c0] sm:$0xff]
                  %1854 = vst [vmem:[%s1740 + $0x2c0] sm:$0xff] %v1853
                  %v1855 = vld [vmem:[%s1739 + $0x1c8] sm:$0xff]
                  %1856 = vst [vmem:[%s1740 + $0x2c8] sm:$0xff] %v1855
                  %v1857 = vld [vmem:[%s1739 + $0x1d0] sm:$0xff]
                  %1858 = vst [vmem:[%s1740 + $0x2d0] sm:$0xff] %v1857
                  %v1859 = vld [vmem:[%s1739 + $0x1d8] sm:$0xff]
                  %1860 = vst [vmem:[%s1740 + $0x2d8] sm:$0xff] %v1859
                  %v1861 = vld [vmem:[%s1739 + $0x1e0] sm:$0xff]
                  %1862 = vst [vmem:[%s1740 + $0x2e0] sm:$0xff] %v1861
                  %v1863 = vld [vmem:[%s1739 + $0x1e8] sm:$0xff]
                  %1864 = vst [vmem:[%s1740 + $0x2e8] sm:$0xff] %v1863
                  %v1865 = vld [vmem:[%s1739 + $0x1f0] sm:$0xff]
                  %1866 = vst [vmem:[%s1740 + $0x2f0] sm:$0xff] %v1865
                  %v1867 = vld [vmem:[%s1739 + $0x1f8] sm:$0xff]
                  %1868 = vst [vmem:[%s1740 + $0x2f8] sm:$0xff] %v1867
                  %v1869 = vld [vmem:[%s1739 + $0x200] sm:$0xff]
                  %1870 = vst [vmem:[%s1740 + $0x400] sm:$0xff] %v1869
                  %v1871 = vld [vmem:[%s1739 + $0x208] sm:$0xff]
                  %1872 = vst [vmem:[%s1740 + $0x408] sm:$0xff] %v1871
                  %v1873 = vld [vmem:[%s1739 + $0x210] sm:$0xff]
                  %1874 = vst [vmem:[%s1740 + $0x410] sm:$0xff] %v1873
                  %v1875 = vld [vmem:[%s1739 + $0x218] sm:$0xff]
                  %1876 = vst [vmem:[%s1740 + $0x418] sm:$0xff] %v1875
                  %v1877 = vld [vmem:[%s1739 + $0x220] sm:$0xff]
                  %1878 = vst [vmem:[%s1740 + $0x420] sm:$0xff] %v1877
                  %v1879 = vld [vmem:[%s1739 + $0x228] sm:$0xff]
                  %1880 = vst [vmem:[%s1740 + $0x428] sm:$0xff] %v1879
                  %v1881 = vld [vmem:[%s1739 + $0x230] sm:$0xff]
                  %1882 = vst [vmem:[%s1740 + $0x430] sm:$0xff] %v1881
                  %v1883 = vld [vmem:[%s1739 + $0x238] sm:$0xff]
                  %1884 = vst [vmem:[%s1740 + $0x438] sm:$0xff] %v1883
                  %v1885 = vld [vmem:[%s1739 + $0x240] sm:$0xff]
                  %1886 = vst [vmem:[%s1740 + $0x440] sm:$0xff] %v1885
                  %v1887 = vld [vmem:[%s1739 + $0x248] sm:$0xff]
                  %1888 = vst [vmem:[%s1740 + $0x448] sm:$0xff] %v1887
                  %v1889 = vld [vmem:[%s1739 + $0x250] sm:$0xff]
                  %1890 = vst [vmem:[%s1740 + $0x450] sm:$0xff] %v1889
                  %v1891 = vld [vmem:[%s1739 + $0x258] sm:$0xff]
                  %1892 = vst [vmem:[%s1740 + $0x458] sm:$0xff] %v1891
                  %v1893 = vld [vmem:[%s1739 + $0x260] sm:$0xff]
                  %1894 = vst [vmem:[%s1740 + $0x460] sm:$0xff] %v1893
                  %v1895 = vld [vmem:[%s1739 + $0x268] sm:$0xff]
                  %1896 = vst [vmem:[%s1740 + $0x468] sm:$0xff] %v1895
                  %v1897 = vld [vmem:[%s1739 + $0x270] sm:$0xff]
                  %1898 = vst [vmem:[%s1740 + $0x470] sm:$0xff] %v1897
                  %v1899 = vld [vmem:[%s1739 + $0x278] sm:$0xff]
                  %1900 = vst [vmem:[%s1740 + $0x478] sm:$0xff] %v1899
                  %v1901 = vld [vmem:[%s1739 + $0x280] sm:$0xff]
                  %1902 = vst [vmem:[%s1740 + $0x480] sm:$0xff] %v1901
                  %v1903 = vld [vmem:[%s1739 + $0x288] sm:$0xff]
                  %1904 = vst [vmem:[%s1740 + $0x488] sm:$0xff] %v1903
                  %v1905 = vld [vmem:[%s1739 + $0x290] sm:$0xff]
                  %1906 = vst [vmem:[%s1740 + $0x490] sm:$0xff] %v1905
                  %v1907 = vld [vmem:[%s1739 + $0x298] sm:$0xff]
                  %1908 = vst [vmem:[%s1740 + $0x498] sm:$0xff] %v1907
                  %v1909 = vld [vmem:[%s1739 + $0x2a0] sm:$0xff]
                  %1910 = vst [vmem:[%s1740 + $0x4a0] sm:$0xff] %v1909
                  %v1911 = vld [vmem:[%s1739 + $0x2a8] sm:$0xff]
                  %1912 = vst [vmem:[%s1740 + $0x4a8] sm:$0xff] %v1911
                  %v1913 = vld [vmem:[%s1739 + $0x2b0] sm:$0xff]
                  %1914 = vst [vmem:[%s1740 + $0x4b0] sm:$0xff] %v1913
                  %v1915 = vld [vmem:[%s1739 + $0x2b8] sm:$0xff]
                  %1916 = vst [vmem:[%s1740 + $0x4b8] sm:$0xff] %v1915
                  %v1917 = vld [vmem:[%s1739 + $0x2c0] sm:$0xff]
                  %1918 = vst [vmem:[%s1740 + $0x4c0] sm:$0xff] %v1917
                  %v1919 = vld [vmem:[%s1739 + $0x2c8] sm:$0xff]
                  %1920 = vst [vmem:[%s1740 + $0x4c8] sm:$0xff] %v1919
                  %v1921 = vld [vmem:[%s1739 + $0x2d0] sm:$0xff]
                  %1922 = vst [vmem:[%s1740 + $0x4d0] sm:$0xff] %v1921
                  %v1923 = vld [vmem:[%s1739 + $0x2d8] sm:$0xff]
                  %1924 = vst [vmem:[%s1740 + $0x4d8] sm:$0xff] %v1923
                  %v1925 = vld [vmem:[%s1739 + $0x2e0] sm:$0xff]
                  %1926 = vst [vmem:[%s1740 + $0x4e0] sm:$0xff] %v1925
                  %v1927 = vld [vmem:[%s1739 + $0x2e8] sm:$0xff]
                  %1928 = vst [vmem:[%s1740 + $0x4e8] sm:$0xff] %v1927
                  %v1929 = vld [vmem:[%s1739 + $0x2f0] sm:$0xff]
                  %1930 = vst [vmem:[%s1740 + $0x4f0] sm:$0xff] %v1929
                  %v1931 = vld [vmem:[%s1739 + $0x2f8] sm:$0xff]
                  %1932 = vst [vmem:[%s1740 + $0x4f8] sm:$0xff] %v1931
                $region101: #{_forward_rows.1} parent=95 // loop_footer
                  %s1738 = sadd.s32 1, %s1734
                $region102: #{_forward_rows.1} parent=95 // loop_footer_branch
                  %1733 = sbr.rel target = $region98
                $region103: #{_forward_rows.1} parent=95 // loop_exit
                  _
              $region96: #{_forward_rows.1} parent=80 // pred_fallthru
                _
              // Predicated region
              $region104: #{_forward_rows.1} parent=80 // pred_check
                _
              $region105: #{_forward_rows.1} parent=80 // pred_check_branch
                %1934 = sbr.rel target = $region107
              $region106: #{_forward_rows.1} parent=80 // pred_region
                _
              $region107: #{_forward_rows.1} parent=80 // pred_fallthru
                _
            $region81: #{_forward_rows.1} parent=76 // pred_fallthru
              _
            // Predicated region
            $region82: #{_forward_rows.1} parent=76 // pred_check
              _
            $region83: #{_forward_rows.1} parent=76 // pred_check_branch
              %1529 = sbr.rel target = $region85
            $region84: #{_forward_rows.1} parent=76 // pred_region
              loop: start=0, step=1, limit=1
              $region86: #{_forward_rows.1} parent=84 // loop_pre_header
                _
              $region87: #{_forward_rows.1} parent=84 // loop_header
                %s1532 = sphi 0, %s1536
                %p1533 = scmp.ge.s32.totalorder %s1532, 1
                %s1537 = sphi %s1517, %s1517
                %s1538 = sphi %s1523, %s1523
              $region88: #{_forward_rows.1} parent=84 // loop_header_branch
                %1535 = sbr.rel (%p1533) target = $region92
              $region89: #{_forward_rows.1} parent=84 // loop_body
                %v1539 = vld [vmem:[%s1537] sm:$0xff]
                %1540 = vst [vmem:[%s1538] sm:$0xff] %v1539
                %v1541 = vld [vmem:[%s1537 + $0x8] sm:$0xff]
                %1542 = vst [vmem:[%s1538 + $0x8] sm:$0xff] %v1541
                %v1543 = vld [vmem:[%s1537 + $0x10] sm:$0xff]
                %1544 = vst [vmem:[%s1538 + $0x10] sm:$0xff] %v1543
                %v1545 = vld [vmem:[%s1537 + $0x18] sm:$0xff]
                %1546 = vst [vmem:[%s1538 + $0x18] sm:$0xff] %v1545
                %v1547 = vld [vmem:[%s1537 + $0x20] sm:$0xff]
                %1548 = vst [vmem:[%s1538 + $0x20] sm:$0xff] %v1547
                %v1549 = vld [vmem:[%s1537 + $0x28] sm:$0xff]
                %1550 = vst [vmem:[%s1538 + $0x28] sm:$0xff] %v1549
                %v1551 = vld [vmem:[%s1537 + $0x30] sm:$0xff]
                %1552 = vst [vmem:[%s1538 + $0x30] sm:$0xff] %v1551
                %v1553 = vld [vmem:[%s1537 + $0x38] sm:$0xff]
                %1554 = vst [vmem:[%s1538 + $0x38] sm:$0xff] %v1553
                %v1555 = vld [vmem:[%s1537 + $0x40] sm:$0xff]
                %1556 = vst [vmem:[%s1538 + $0x40] sm:$0xff] %v1555
                %v1557 = vld [vmem:[%s1537 + $0x48] sm:$0xff]
                %1558 = vst [vmem:[%s1538 + $0x48] sm:$0xff] %v1557
                %v1559 = vld [vmem:[%s1537 + $0x50] sm:$0xff]
                %1560 = vst [vmem:[%s1538 + $0x50] sm:$0xff] %v1559
                %v1561 = vld [vmem:[%s1537 + $0x58] sm:$0xff]
                %1562 = vst [vmem:[%s1538 + $0x58] sm:$0xff] %v1561
                %v1563 = vld [vmem:[%s1537 + $0x60] sm:$0xff]
                %1564 = vst [vmem:[%s1538 + $0x60] sm:$0xff] %v1563
                %v1565 = vld [vmem:[%s1537 + $0x68] sm:$0xff]
                %1566 = vst [vmem:[%s1538 + $0x68] sm:$0xff] %v1565
                %v1567 = vld [vmem:[%s1537 + $0x70] sm:$0xff]
                %1568 = vst [vmem:[%s1538 + $0x70] sm:$0xff] %v1567
                %v1569 = vld [vmem:[%s1537 + $0x78] sm:$0xff]
                %1570 = vst [vmem:[%s1538 + $0x78] sm:$0xff] %v1569
                %v1571 = vld [vmem:[%s1537 + $0x80] sm:$0xff]
                %1572 = vst [vmem:[%s1538 + $0x80] sm:$0xff] %v1571
                %v1573 = vld [vmem:[%s1537 + $0x88] sm:$0xff]
                %1574 = vst [vmem:[%s1538 + $0x88] sm:$0xff] %v1573
                %v1575 = vld [vmem:[%s1537 + $0x90] sm:$0xff]
                %1576 = vst [vmem:[%s1538 + $0x90] sm:$0xff] %v1575
                %v1577 = vld [vmem:[%s1537 + $0x98] sm:$0xff]
                %1578 = vst [vmem:[%s1538 + $0x98] sm:$0xff] %v1577
                %v1579 = vld [vmem:[%s1537 + $0xa0] sm:$0xff]
                %1580 = vst [vmem:[%s1538 + $0xa0] sm:$0xff] %v1579
                %v1581 = vld [vmem:[%s1537 + $0xa8] sm:$0xff]
                %1582 = vst [vmem:[%s1538 + $0xa8] sm:$0xff] %v1581
                %v1583 = vld [vmem:[%s1537 + $0xb0] sm:$0xff]
                %1584 = vst [vmem:[%s1538 + $0xb0] sm:$0xff] %v1583
                %v1585 = vld [vmem:[%s1537 + $0xb8] sm:$0xff]
                %1586 = vst [vmem:[%s1538 + $0xb8] sm:$0xff] %v1585
                %v1587 = vld [vmem:[%s1537 + $0xc0] sm:$0xff]
                %1588 = vst [vmem:[%s1538 + $0xc0] sm:$0xff] %v1587
                %v1589 = vld [vmem:[%s1537 + $0xc8] sm:$0xff]
                %1590 = vst [vmem:[%s1538 + $0xc8] sm:$0xff] %v1589
                %v1591 = vld [vmem:[%s1537 + $0xd0] sm:$0xff]
                %1592 = vst [vmem:[%s1538 + $0xd0] sm:$0xff] %v1591
                %v1593 = vld [vmem:[%s1537 + $0xd8] sm:$0xff]
                %1594 = vst [vmem:[%s1538 + $0xd8] sm:$0xff] %v1593
                %v1595 = vld [vmem:[%s1537 + $0xe0] sm:$0xff]
                %1596 = vst [vmem:[%s1538 + $0xe0] sm:$0xff] %v1595
                %v1597 = vld [vmem:[%s1537 + $0xe8] sm:$0xff]
                %1598 = vst [vmem:[%s1538 + $0xe8] sm:$0xff] %v1597
                %v1599 = vld [vmem:[%s1537 + $0xf0] sm:$0xff]
                %1600 = vst [vmem:[%s1538 + $0xf0] sm:$0xff] %v1599
                %v1601 = vld [vmem:[%s1537 + $0xf8] sm:$0xff]
                %1602 = vst [vmem:[%s1538 + $0xf8] sm:$0xff] %v1601
                %v1603 = vld [vmem:[%s1537 + $0x100] sm:$0xff]
                %1604 = vst [vmem:[%s1538 + $0x200] sm:$0xff] %v1603
                %v1605 = vld [vmem:[%s1537 + $0x108] sm:$0xff]
                %1606 = vst [vmem:[%s1538 + $0x208] sm:$0xff] %v1605
                %v1607 = vld [vmem:[%s1537 + $0x110] sm:$0xff]
                %1608 = vst [vmem:[%s1538 + $0x210] sm:$0xff] %v1607
                %v1609 = vld [vmem:[%s1537 + $0x118] sm:$0xff]
                %1610 = vst [vmem:[%s1538 + $0x218] sm:$0xff] %v1609
                %v1611 = vld [vmem:[%s1537 + $0x120] sm:$0xff]
                %1612 = vst [vmem:[%s1538 + $0x220] sm:$0xff] %v1611
                %v1613 = vld [vmem:[%s1537 + $0x128] sm:$0xff]
                %1614 = vst [vmem:[%s1538 + $0x228] sm:$0xff] %v1613
                %v1615 = vld [vmem:[%s1537 + $0x130] sm:$0xff]
                %1616 = vst [vmem:[%s1538 + $0x230] sm:$0xff] %v1615
                %v1617 = vld [vmem:[%s1537 + $0x138] sm:$0xff]
                %1618 = vst [vmem:[%s1538 + $0x238] sm:$0xff] %v1617
                %v1619 = vld [vmem:[%s1537 + $0x140] sm:$0xff]
                %1620 = vst [vmem:[%s1538 + $0x240] sm:$0xff] %v1619
                %v1621 = vld [vmem:[%s1537 + $0x148] sm:$0xff]
                %1622 = vst [vmem:[%s1538 + $0x248] sm:$0xff] %v1621
                %v1623 = vld [vmem:[%s1537 + $0x150] sm:$0xff]
                %1624 = vst [vmem:[%s1538 + $0x250] sm:$0xff] %v1623
                %v1625 = vld [vmem:[%s1537 + $0x158] sm:$0xff]
                %1626 = vst [vmem:[%s1538 + $0x258] sm:$0xff] %v1625
                %v1627 = vld [vmem:[%s1537 + $0x160] sm:$0xff]
                %1628 = vst [vmem:[%s1538 + $0x260] sm:$0xff] %v1627
                %v1629 = vld [vmem:[%s1537 + $0x168] sm:$0xff]
                %1630 = vst [vmem:[%s1538 + $0x268] sm:$0xff] %v1629
                %v1631 = vld [vmem:[%s1537 + $0x170] sm:$0xff]
                %1632 = vst [vmem:[%s1538 + $0x270] sm:$0xff] %v1631
                %v1633 = vld [vmem:[%s1537 + $0x178] sm:$0xff]
                %1634 = vst [vmem:[%s1538 + $0x278] sm:$0xff] %v1633
                %v1635 = vld [vmem:[%s1537 + $0x180] sm:$0xff]
                %1636 = vst [vmem:[%s1538 + $0x280] sm:$0xff] %v1635
                %v1637 = vld [vmem:[%s1537 + $0x188] sm:$0xff]
                %1638 = vst [vmem:[%s1538 + $0x288] sm:$0xff] %v1637
                %v1639 = vld [vmem:[%s1537 + $0x190] sm:$0xff]
                %1640 = vst [vmem:[%s1538 + $0x290] sm:$0xff] %v1639
                %v1641 = vld [vmem:[%s1537 + $0x198] sm:$0xff]
                %1642 = vst [vmem:[%s1538 + $0x298] sm:$0xff] %v1641
                %v1643 = vld [vmem:[%s1537 + $0x1a0] sm:$0xff]
                %1644 = vst [vmem:[%s1538 + $0x2a0] sm:$0xff] %v1643
                %v1645 = vld [vmem:[%s1537 + $0x1a8] sm:$0xff]
                %1646 = vst [vmem:[%s1538 + $0x2a8] sm:$0xff] %v1645
                %v1647 = vld [vmem:[%s1537 + $0x1b0] sm:$0xff]
                %1648 = vst [vmem:[%s1538 + $0x2b0] sm:$0xff] %v1647
                %v1649 = vld [vmem:[%s1537 + $0x1b8] sm:$0xff]
                %1650 = vst [vmem:[%s1538 + $0x2b8] sm:$0xff] %v1649
                %v1651 = vld [vmem:[%s1537 + $0x1c0] sm:$0xff]
                %1652 = vst [vmem:[%s1538 + $0x2c0] sm:$0xff] %v1651
                %v1653 = vld [vmem:[%s1537 + $0x1c8] sm:$0xff]
                %1654 = vst [vmem:[%s1538 + $0x2c8] sm:$0xff] %v1653
                %v1655 = vld [vmem:[%s1537 + $0x1d0] sm:$0xff]
                %1656 = vst [vmem:[%s1538 + $0x2d0] sm:$0xff] %v1655
                %v1657 = vld [vmem:[%s1537 + $0x1d8] sm:$0xff]
                %1658 = vst [vmem:[%s1538 + $0x2d8] sm:$0xff] %v1657
                %v1659 = vld [vmem:[%s1537 + $0x1e0] sm:$0xff]
                %1660 = vst [vmem:[%s1538 + $0x2e0] sm:$0xff] %v1659
                %v1661 = vld [vmem:[%s1537 + $0x1e8] sm:$0xff]
                %1662 = vst [vmem:[%s1538 + $0x2e8] sm:$0xff] %v1661
                %v1663 = vld [vmem:[%s1537 + $0x1f0] sm:$0xff]
                %1664 = vst [vmem:[%s1538 + $0x2f0] sm:$0xff] %v1663
                %v1665 = vld [vmem:[%s1537 + $0x1f8] sm:$0xff]
                %1666 = vst [vmem:[%s1538 + $0x2f8] sm:$0xff] %v1665
                %v1667 = vld [vmem:[%s1537 + $0x200] sm:$0xff]
                %1668 = vst [vmem:[%s1538 + $0x400] sm:$0xff] %v1667
                %v1669 = vld [vmem:[%s1537 + $0x208] sm:$0xff]
                %1670 = vst [vmem:[%s1538 + $0x408] sm:$0xff] %v1669
                %v1671 = vld [vmem:[%s1537 + $0x210] sm:$0xff]
                %1672 = vst [vmem:[%s1538 + $0x410] sm:$0xff] %v1671
                %v1673 = vld [vmem:[%s1537 + $0x218] sm:$0xff]
                %1674 = vst [vmem:[%s1538 + $0x418] sm:$0xff] %v1673
                %v1675 = vld [vmem:[%s1537 + $0x220] sm:$0xff]
                %1676 = vst [vmem:[%s1538 + $0x420] sm:$0xff] %v1675
                %v1677 = vld [vmem:[%s1537 + $0x228] sm:$0xff]
                %1678 = vst [vmem:[%s1538 + $0x428] sm:$0xff] %v1677
                %v1679 = vld [vmem:[%s1537 + $0x230] sm:$0xff]
                %1680 = vst [vmem:[%s1538 + $0x430] sm:$0xff] %v1679
                %v1681 = vld [vmem:[%s1537 + $0x238] sm:$0xff]
                %1682 = vst [vmem:[%s1538 + $0x438] sm:$0xff] %v1681
                %v1683 = vld [vmem:[%s1537 + $0x240] sm:$0xff]
                %1684 = vst [vmem:[%s1538 + $0x440] sm:$0xff] %v1683
                %v1685 = vld [vmem:[%s1537 + $0x248] sm:$0xff]
                %1686 = vst [vmem:[%s1538 + $0x448] sm:$0xff] %v1685
                %v1687 = vld [vmem:[%s1537 + $0x250] sm:$0xff]
                %1688 = vst [vmem:[%s1538 + $0x450] sm:$0xff] %v1687
                %v1689 = vld [vmem:[%s1537 + $0x258] sm:$0xff]
                %1690 = vst [vmem:[%s1538 + $0x458] sm:$0xff] %v1689
                %v1691 = vld [vmem:[%s1537 + $0x260] sm:$0xff]
                %1692 = vst [vmem:[%s1538 + $0x460] sm:$0xff] %v1691
                %v1693 = vld [vmem:[%s1537 + $0x268] sm:$0xff]
                %1694 = vst [vmem:[%s1538 + $0x468] sm:$0xff] %v1693
                %v1695 = vld [vmem:[%s1537 + $0x270] sm:$0xff]
                %1696 = vst [vmem:[%s1538 + $0x470] sm:$0xff] %v1695
                %v1697 = vld [vmem:[%s1537 + $0x278] sm:$0xff]
                %1698 = vst [vmem:[%s1538 + $0x478] sm:$0xff] %v1697
                %v1699 = vld [vmem:[%s1537 + $0x280] sm:$0xff]
                %1700 = vst [vmem:[%s1538 + $0x480] sm:$0xff] %v1699
                %v1701 = vld [vmem:[%s1537 + $0x288] sm:$0xff]
                %1702 = vst [vmem:[%s1538 + $0x488] sm:$0xff] %v1701
                %v1703 = vld [vmem:[%s1537 + $0x290] sm:$0xff]
                %1704 = vst [vmem:[%s1538 + $0x490] sm:$0xff] %v1703
                %v1705 = vld [vmem:[%s1537 + $0x298] sm:$0xff]
                %1706 = vst [vmem:[%s1538 + $0x498] sm:$0xff] %v1705
                %v1707 = vld [vmem:[%s1537 + $0x2a0] sm:$0xff]
                %1708 = vst [vmem:[%s1538 + $0x4a0] sm:$0xff] %v1707
                %v1709 = vld [vmem:[%s1537 + $0x2a8] sm:$0xff]
                %1710 = vst [vmem:[%s1538 + $0x4a8] sm:$0xff] %v1709
                %v1711 = vld [vmem:[%s1537 + $0x2b0] sm:$0xff]
                %1712 = vst [vmem:[%s1538 + $0x4b0] sm:$0xff] %v1711
                %v1713 = vld [vmem:[%s1537 + $0x2b8] sm:$0xff]
                %1714 = vst [vmem:[%s1538 + $0x4b8] sm:$0xff] %v1713
                %v1715 = vld [vmem:[%s1537 + $0x2c0] sm:$0xff]
                %1716 = vst [vmem:[%s1538 + $0x4c0] sm:$0xff] %v1715
                %v1717 = vld [vmem:[%s1537 + $0x2c8] sm:$0xff]
                %1718 = vst [vmem:[%s1538 + $0x4c8] sm:$0xff] %v1717
                %v1719 = vld [vmem:[%s1537 + $0x2d0] sm:$0xff]
                %1720 = vst [vmem:[%s1538 + $0x4d0] sm:$0xff] %v1719
                %v1721 = vld [vmem:[%s1537 + $0x2d8] sm:$0xff]
                %1722 = vst [vmem:[%s1538 + $0x4d8] sm:$0xff] %v1721
                %v1723 = vld [vmem:[%s1537 + $0x2e0] sm:$0xff]
                %1724 = vst [vmem:[%s1538 + $0x4e0] sm:$0xff] %v1723
                %v1725 = vld [vmem:[%s1537 + $0x2e8] sm:$0xff]
                %1726 = vst [vmem:[%s1538 + $0x4e8] sm:$0xff] %v1725
                %v1727 = vld [vmem:[%s1537 + $0x2f0] sm:$0xff]
                %1728 = vst [vmem:[%s1538 + $0x4f0] sm:$0xff] %v1727
                %v1729 = vld [vmem:[%s1537 + $0x2f8] sm:$0xff]
                %1730 = vst [vmem:[%s1538 + $0x4f8] sm:$0xff] %v1729
              $region90: #{_forward_rows.1} parent=84 // loop_footer
                %s1536 = sadd.s32 1, %s1532
              $region91: #{_forward_rows.1} parent=84 // loop_footer_branch
                %1531 = sbr.rel target = $region87
              $region92: #{_forward_rows.1} parent=84 // loop_exit
                _
            $region85: #{_forward_rows.1} parent=76 // pred_fallthru
              _
          $region77: #{_forward_rows.1} parent=72 // pred_fallthru
            _
          %1935 = vnop
        $region73: #{_forward_rows.1} parent=57 // pred_fallthru
          _
      $region58: #{_forward_rows.1} parent=5 // pred_fallthru
        _
      %p1936 = scmp.le.s32.totalorder 2, %s29
      // Predicated region
      $region108: #{_forward_rows.1} parent=5 // pred_check
        %p1937 = pneg %p1936
      $region109: #{_forward_rows.1} parent=5 // pred_check_branch
        %1939 = sbr.rel (%p1937) target = $region111
      $region110: #{_forward_rows.1} parent=5 // pred_region
        %s1940 = ssub.s32 %s29, 2
        // Predicated region
        $region112: #{_forward_rows.1} parent=110 // pred_check
          %p1941 = pneg %p84
        $region113: #{_forward_rows.1} parent=110 // pred_check_branch
          %1943 = sbr.rel (%p1941) target = $region115
        $region114: #{_forward_rows.1} parent=110 // pred_region
          %s1944 = sand.u32 %s69, 1
          %s1945 = sand.u32 %s69, 1
          %s1946 = smul.addr %s1945, 768
          %s1947 = scalar_lea.vmem [#allocation8], %s1946
        $region115: #{_forward_rows.1} parent=110 // pred_fallthru
          _
      $region111: #{_forward_rows.1} parent=5 // pred_fallthru
        _
    $region6: #{_forward_rows.1} parent=1 // loop_footer
      %s33 = sadd.s32 1, %s29
    $region7: #{_forward_rows.1} parent=1 // loop_footer_branch
      %28 = sbr.rel target = $region3
    $region8: #{_forward_rows.1} parent=1 // loop_exit
      _

</llo_original>
